<compile_context>
chip_gen: v7x
topology: tpu7x:2x2x1
jax: 0.10.0
libtpu: 0.0.40
codegen_flags: <defaults>
</compile_context>

<pallas_src>
import functools

import jax
import jax.numpy as jnp
from jax.experimental import pallas as pl
from jax.experimental.pallas import tpu as pltpu


# ---------------------------------------------------------------------------
# Pallas kernel: one (batch, query-tile) block per grid step.
# ---------------------------------------------------------------------------
def _encoder_layer_kernel(
    xq_ref, xkv_ref, mask_ref,
    wq_ref, bq_ref, wk_ref, bk_ref, wv_ref, bv_ref, wo3_ref, bo_ref,
    ln1g_ref, ln1b_ref,
    w1_ref, b1_ref, w2_ref, b2_ref,
    ln2g_ref, ln2b_ref,
    out_ref,
    *, num_heads: int, eps: float,
):
    f32 = jnp.float32
    mm = wq_ref.dtype                       # matmul operand dtype (bf16 or f32)

    xq = xq_ref[0]                          # [TQ, D]  query / residual rows
    xkv = xkv_ref[0]                        # [S,  D]  full sequence (K/V source)

    TQ, D = xq.shape
    S = xkv.shape[0]
    H = num_heads
    dh = D // H
    scale = 1.0 / (dh ** 0.5)

    xq_mm = xq.astype(mm)
    xkv_mm = xkv.astype(mm)

    # --- QKV projections: full-width 2-D matmuls on the MXU, f32 accumulate.
    q2 = jnp.dot(xq_mm, wq_ref[...], preferred_element_type=f32) + bq_ref[...]   # [TQ, D]
    k2 = jnp.dot(xkv_mm, wk_ref[...], preferred_element_type=f32) + bk_ref[...]  # [S,  D]
    v2 = jnp.dot(xkv_mm, wv_ref[...], preferred_element_type=f32) + bv_ref[...]  # [S,  D]

    # --- Head split [*, D] -> [H, *, dh].  This is the explicit relayout
    # (equivalent to reshape(*, H, dh).transpose(1, 0, 2)) done with static
    # lane slices + a leading-axis stack, which lowers robustly in Mosaic.
    def split_heads(t):
        return jnp.stack([t[:, h * dh:(h + 1) * dh] for h in range(H)], axis=0)

    qh = split_heads(q2).astype(mm)         # [H, TQ, dh]
    kh = split_heads(k2).astype(mm)         # [H, S,  dh]
    vh = split_heads(v2).astype(mm)         # [H, S,  dh]

    # --- Attention: all heads batched on the MXU; no kh.T materialized.
    logits = jnp.einsum("hqe,hke->hqk", qh, kh,
                        preferred_element_type=f32) * scale                      # [H, TQ, S]
    neg_mask = mask_ref[0].astype(f32) * (-1e9)      # [1, S], hoisted (once/step)
    logits = logits + neg_mask[None]                 # broadcast over heads & rows

    m = jnp.max(logits, axis=-1, keepdims=True)
    e = jnp.exp(logits - m)
    p = e * pl.reciprocal(jnp.sum(e, axis=-1, keepdims=True), approx=True)

    ctx = jnp.einsum("hqk,hke->hqe", p.astype(mm), vh,
                     preferred_element_type=f32)                                  # [H, TQ, dh]
    # Output projection: batched [H] x (TQ,dh)@(dh,D), then reduce over heads
    # (mathematically identical to concat(heads) @ Wo).
    proj = jnp.einsum("hqe,hed->hqd", ctx.astype(mm), wo3_ref[...],
                      preferred_element_type=f32)                                 # [H, TQ, D]
    attn = jnp.sum(proj, axis=0) + bo_ref[...]                                    # [TQ, D]
    # dropout1: identity (inference).

    # --- Residual + LayerNorm 1 (f32 statistics).
    y = xq.astype(f32) + attn
    mu = jnp.mean(y, axis=-1, keepdims=True)
    var = jnp.mean(jnp.square(y - mu), axis=-1, keepdims=True)
    out1 = (y - mu) * jax.lax.rsqrt(var + eps) * ln1g_ref[...] + ln1b_ref[...]

    # --- FFN (Linear -> ReLU -> Linear), tiled by the query tile.
    h1 = jnp.dot(out1.astype(mm), w1_ref[...], preferred_element_type=f32) + b1_ref[...]
    h1 = jnp.maximum(h1, 0.0)
    ffn = jnp.dot(h1.astype(mm), w2_ref[...], preferred_element_type=f32) + b2_ref[...]
    # dropout2: identity (inference).

    # --- Residual + LayerNorm 2.
    z = out1 + ffn
    mu2 = jnp.mean(z, axis=-1, keepdims=True)
    var2 = jnp.mean(jnp.square(z - mu2), axis=-1, keepdims=True)
    out2 = (z - mu2) * jax.lax.rsqrt(var2 + eps) * ln2g_ref[...] + ln2b_ref[...]

    out_ref[0] = out2.astype(out_ref.dtype)


# ---------------------------------------------------------------------------
# Wrapper
# ---------------------------------------------------------------------------
def encoder_layer(x, mask, params, *, num_heads, q_tile=None,
                  matmul_dtype=jnp.bfloat16, eps=1e-6):
    B, S, D = x.shape
    H = num_heads
    assert D % H == 0
    dh = D // H

    if q_tile is None:
        q_tile = S if S <= 128 else 128
    assert S % q_tile == 0 and (q_tile == S or q_tile % 8 == 0)
    n_qt = S // q_tile

    mm, f32 = matmul_dtype, jnp.float32

    # Matmul operands in `matmul_dtype` (bf16 keeps the MXU at full rate on
    # v5e/v6e/v7x with f32 accumulation); biases / LN params stay f32 so all
    # element-wise VPU math is f32.  Wo is pre-reshaped head-major wrapper-side.
    weights = [
        params["wq"].astype(mm), params["bq"].astype(f32),
        params["wk"].astype(mm), params["bk"].astype(f32),
        params["wv"].astype(mm), params["bv"].astype(f32),
        params["wo"].reshape(H, dh, D).astype(mm), params["bo"].astype(f32),
        params["ln1_g"].astype(f32), params["ln1_b"].astype(f32),
        params["w1"].astype(mm), params["b1"].astype(f32),
        params["w2"].astype(mm), params["b2"].astype(f32),
        params["ln2_g"].astype(f32), params["ln2_b"].astype(f32),
    ]

    def const_spec(a):  # full block, same block every step -> no re-DMA
        zeros = (0,) * a.ndim
        return pl.BlockSpec(a.shape, lambda b, s, _z=zeros: _z)

    in_specs = [
        pl.BlockSpec((1, q_tile, D), lambda b, s: (b, s, 0)),  # x: query/residual tile
        pl.BlockSpec((1, S, D), lambda b, s: (b, 0, 0)),       # x: full sequence for K/V
        pl.BlockSpec((1, 1, S), lambda b, s: (b, 0, 0)),       # mask
    ] + [const_spec(w) for w in weights]

    kernel = functools.partial(_encoder_layer_kernel, num_heads=H, eps=eps)

    return pl.pallas_call(
        kernel,
        out_shape=jax.ShapeDtypeStruct((B, S, D), x.dtype),
        grid_spec=pltpu.PrefetchScalarGridSpec(
            num_scalar_prefetch=0,
            grid=(B, n_qt),
            in_specs=in_specs,
            out_specs=pl.BlockSpec((1, q_tile, D), lambda b, s: (b, s, 0)),
        ),
        compiler_params=pltpu.CompilerParams(
            dimension_semantics=("parallel", "parallel"),
            vmem_limit_bytes=48 * 1024 * 1024,   # < v7x 64 MiB physical VMEM
        ),
    )(x, x, mask, *weights)


# ---------------------------------------------------------------------------
# Pure-JAX reference (same math) for a correctness check.
# ---------------------------------------------------------------------------
def ref_encoder_layer(x, mask, p, *, num_heads, eps=1e-6):
    B, S, D = x.shape
    dh = D // num_heads

    def ln(y, g, b):
        mu = jnp.mean(y, -1, keepdims=True)
        var = jnp.mean((y - mu) ** 2, -1, keepdims=True)
        return (y - mu) / jnp.sqrt(var + eps) * g + b

    q = x @ p["wq"] + p["bq"]
    k = x @ p["wk"] + p["bk"]
    v = x @ p["wv"] + p["bv"]
    q = q.reshape(B, S, num_heads, dh).transpose(0, 2, 1, 3)
    k = k.reshape(B, S, num_heads, dh).transpose(0, 2, 1, 3)
    v = v.reshape(B, S, num_heads, dh).transpose(0, 2, 1, 3)
    logits = jnp.einsum("bhqd,bhkd->bhqk", q, k) / jnp.sqrt(jnp.float32(dh))
    logits = logits + mask[:, :, None, :] * (-1e9)   # mask [B,1,S] -> [B,1,1,S]
    attn = jax.nn.softmax(logits, axis=-1)
    ctx = jnp.einsum("bhqk,bhkd->bhqd", attn, v).transpose(0, 2, 1, 3).reshape(B, S, D)
    attn_out = ctx @ p["wo"] + p["bo"]
    out1 = ln(x + attn_out, p["ln1_g"], p["ln1_b"])
    ffn = jnp.maximum(out1 @ p["w1"] + p["b1"], 0.0) @ p["w2"] + p["b2"]
    return ln(out1 + ffn, p["ln2_g"], p["ln2_b"])


# ---------------------------------------------------------------------------
if __name__ == "__main__":
    B, S, D, H, DFF = 2, 8, 32, 4, 64

    key = jax.random.PRNGKey(0)
    keys = jax.random.split(key, 16)

    def w(k, shape):
        return jax.random.normal(k, shape, jnp.float32) * 0.02

    params = {
        "wq": w(keys[0], (D, D)),  "bq": w(keys[1], (1, D)),
        "wk": w(keys[2], (D, D)),  "bk": w(keys[3], (1, D)),
        "wv": w(keys[4], (D, D)),  "bv": w(keys[5], (1, D)),
        "wo": w(keys[6], (D, D)),  "bo": w(keys[7], (1, D)),
        "ln1_g": 1.0 + w(keys[8], (1, D)), "ln1_b": w(keys[9], (1, D)),
        "w1": w(keys[10], (D, DFF)), "b1": w(keys[11], (1, DFF)),
        "w2": w(keys[12], (DFF, D)), "b2": w(keys[13], (1, D)),
        "ln2_g": 1.0 + w(keys[14], (1, D)), "ln2_b": w(keys[15], (1, D)),
    }

    x = jax.random.normal(jax.random.fold_in(key, 100), (B, S, D), jnp.float32)
    # mask: last 2 positions of batch 1 are padded (1.0 = masked out)
    mask = jnp.zeros((B, 1, S), jnp.float32).at[1, 0, -2:].set(1.0)

    ref = ref_encoder_layer(x, mask, params, num_heads=H)

    # f32-operand path: tight check against the reference.
    out_f32 = jax.block_until_ready(
        encoder_layer(x, mask, params, num_heads=H, matmul_dtype=jnp.float32))
    assert out_f32.shape == (B, S, D)
    err32 = jnp.max(jnp.abs(out_f32 - ref))
    assert jnp.allclose(out_f32, ref, rtol=2e-3, atol=2e-3), f"f32 max abs err {err32}"

    # Default path: bf16 matmul operands, f32 accumulation / statistics.
    out_bf16 = jax.block_until_ready(encoder_layer(x, mask, params, num_heads=H))
    errbf = jnp.max(jnp.abs(out_bf16 - ref))
    assert jnp.allclose(out_bf16, ref, rtol=5e-2, atol=5e-2), f"bf16 max abs err {errbf}"

    print("KERNEL_OK")
</pallas_src>

<mosaic_0001>
module attributes {stable_mosaic.version = 11 : i64} {
  func.func @_encoder_layer_kernel(%arg0: i32, %arg1: i32, %arg2: memref<1x8x32xf32, #tpu.memory_space<vmem>>, %arg3: memref<1x8x32xf32, #tpu.memory_space<vmem>>, %arg4: memref<1x1x8xf32, #tpu.memory_space<vmem>>, %arg5: memref<32x32xf32, #tpu.memory_space<vmem>>, %arg6: memref<1x32xf32, #tpu.memory_space<vmem>>, %arg7: memref<32x32xf32, #tpu.memory_space<vmem>>, %arg8: memref<1x32xf32, #tpu.memory_space<vmem>>, %arg9: memref<32x32xf32, #tpu.memory_space<vmem>>, %arg10: memref<1x32xf32, #tpu.memory_space<vmem>>, %arg11: memref<4x8x32xf32, #tpu.memory_space<vmem>>, %arg12: memref<1x32xf32, #tpu.memory_space<vmem>>, %arg13: memref<1x32xf32, #tpu.memory_space<vmem>>, %arg14: memref<1x32xf32, #tpu.memory_space<vmem>>, %arg15: memref<32x64xf32, #tpu.memory_space<vmem>>, %arg16: memref<1x64xf32, #tpu.memory_space<vmem>>, %arg17: memref<64x32xf32, #tpu.memory_space<vmem>>, %arg18: memref<1x32xf32, #tpu.memory_space<vmem>>, %arg19: memref<1x32xf32, #tpu.memory_space<vmem>>, %arg20: memref<1x32xf32, #tpu.memory_space<vmem>>, %arg21: memref<1x8x32xf32, #tpu.memory_space<vmem>>) attributes {dimension_semantics = [#tpu.dimension_semantics<parallel>, #tpu.dimension_semantics<parallel>], iteration_bounds = array<i64: 2, 1>, scalar_prefetch = 0 : i64, scratch_operands = 0 : i64, tpu.core_type = #tpu.core_type<tc>, window_params = [{transform_indices = @transform_0, window_bounds = array<i64: 1, 8, 32>}, {transform_indices = @transform_1, window_bounds = array<i64: 1, 8, 32>}, {transform_indices = @transform_2, window_bounds = array<i64: 1, 1, 8>}, {pipeline_mode = #tpu.pipeline_mode<synchronous>, transform_indices = @transform_3, window_bounds = array<i64: 32, 32>}, {pipeline_mode = #tpu.pipeline_mode<synchronous>, transform_indices = @transform_4, window_bounds = array<i64: 1, 32>}, {pipeline_mode = #tpu.pipeline_mode<synchronous>, transform_indices = @transform_5, window_bounds = array<i64: 32, 32>}, {pipeline_mode = #tpu.pipeline_mode<synchronous>, transform_indices = @transform_6, window_bounds = array<i64: 1, 32>}, {pipeline_mode = #tpu.pipeline_mode<synchronous>, transform_indices = @transform_7, window_bounds = array<i64: 32, 32>}, {pipeline_mode = #tpu.pipeline_mode<synchronous>, transform_indices = @transform_8, window_bounds = array<i64: 1, 32>}, {pipeline_mode = #tpu.pipeline_mode<synchronous>, transform_indices = @transform_9, window_bounds = array<i64: 4, 8, 32>}, {pipeline_mode = #tpu.pipeline_mode<synchronous>, transform_indices = @transform_10, window_bounds = array<i64: 1, 32>}, {pipeline_mode = #tpu.pipeline_mode<synchronous>, transform_indices = @transform_11, window_bounds = array<i64: 1, 32>}, {pipeline_mode = #tpu.pipeline_mode<synchronous>, transform_indices = @transform_12, window_bounds = array<i64: 1, 32>}, {pipeline_mode = #tpu.pipeline_mode<synchronous>, transform_indices = @transform_13, window_bounds = array<i64: 32, 64>}, {pipeline_mode = #tpu.pipeline_mode<synchronous>, transform_indices = @transform_14, window_bounds = array<i64: 1, 64>}, {pipeline_mode = #tpu.pipeline_mode<synchronous>, transform_indices = @transform_15, window_bounds = array<i64: 64, 32>}, {pipeline_mode = #tpu.pipeline_mode<synchronous>, transform_indices = @transform_16, window_bounds = array<i64: 1, 32>}, {pipeline_mode = #tpu.pipeline_mode<synchronous>, transform_indices = @transform_17, window_bounds = array<i64: 1, 32>}, {pipeline_mode = #tpu.pipeline_mode<synchronous>, transform_indices = @transform_18, window_bounds = array<i64: 1, 32>}, {transform_indices = @transform_19, window_bounds = array<i64: 1, 8, 32>}]} {
    %c0 = arith.constant 0 : index
    %c0_0 = arith.constant 0 : index
    %c0_1 = arith.constant 0 : index
    %0 = vector.load %arg2[%c0, %c0_0, %c0_1] : memref<1x8x32xf32, #tpu.memory_space<vmem>>, vector<1x8x32xf32>
    %1 = vector.shape_cast %0 : vector<1x8x32xf32> to vector<8x32xf32>
    %c0_2 = arith.constant 0 : index
    %c0_3 = arith.constant 0 : index
    %c0_4 = arith.constant 0 : index
    %2 = vector.load %arg3[%c0_2, %c0_3, %c0_4] : memref<1x8x32xf32, #tpu.memory_space<vmem>>, vector<1x8x32xf32>
    %3 = vector.shape_cast %2 : vector<1x8x32xf32> to vector<8x32xf32>
    %c0_5 = arith.constant 0 : index
    %c0_6 = arith.constant 0 : index
    %4 = vector.load %arg5[%c0_5, %c0_6] : memref<32x32xf32, #tpu.memory_space<vmem>>, vector<32x32xf32>
    %cst = arith.constant dense<0.000000e+00> : vector<8x32xf32>
    %5 = tpu.matmul %1, %4, %cst {dimension_numbers = #tpu.dot_dimension_numbers<[1], [0], [0], [1], [0, 0, 1, 1], [], []>} : vector<8x32xf32>, vector<32x32xf32>, vector<8x32xf32> -> vector<8x32xf32>
    %c0_7 = arith.constant 0 : index
    %c0_8 = arith.constant 0 : index
    %6 = vector.load %arg6[%c0_7, %c0_8] : memref<1x32xf32, #tpu.memory_space<vmem>>, vector<1x32xf32>
    %7 = vector.broadcast %6 : vector<1x32xf32> to vector<8x32xf32>
    %8 = arith.addf %5, %7 : vector<8x32xf32>
    %c0_9 = arith.constant 0 : index
    %c0_10 = arith.constant 0 : index
    %9 = vector.load %arg7[%c0_9, %c0_10] : memref<32x32xf32, #tpu.memory_space<vmem>>, vector<32x32xf32>
    %cst_11 = arith.constant dense<0.000000e+00> : vector<8x32xf32>
    %10 = tpu.matmul %3, %9, %cst_11 {dimension_numbers = #tpu.dot_dimension_numbers<[1], [0], [0], [1], [0, 0, 1, 1], [], []>} : vector<8x32xf32>, vector<32x32xf32>, vector<8x32xf32> -> vector<8x32xf32>
    %c0_12 = arith.constant 0 : index
    %c0_13 = arith.constant 0 : index
    %11 = vector.load %arg8[%c0_12, %c0_13] : memref<1x32xf32, #tpu.memory_space<vmem>>, vector<1x32xf32>
    %12 = vector.broadcast %11 : vector<1x32xf32> to vector<8x32xf32>
    %13 = arith.addf %10, %12 : vector<8x32xf32>
    %c0_14 = arith.constant 0 : index
    %c0_15 = arith.constant 0 : index
    %14 = vector.load %arg9[%c0_14, %c0_15] : memref<32x32xf32, #tpu.memory_space<vmem>>, vector<32x32xf32>
    %cst_16 = arith.constant dense<0.000000e+00> : vector<8x32xf32>
    %15 = tpu.matmul %3, %14, %cst_16 {dimension_numbers = #tpu.dot_dimension_numbers<[1], [0], [0], [1], [0, 0, 1, 1], [], []>} : vector<8x32xf32>, vector<32x32xf32>, vector<8x32xf32> -> vector<8x32xf32>
    %c0_17 = arith.constant 0 : index
    %c0_18 = arith.constant 0 : index
    %16 = vector.load %arg10[%c0_17, %c0_18] : memref<1x32xf32, #tpu.memory_space<vmem>>, vector<1x32xf32>
    %17 = vector.broadcast %16 : vector<1x32xf32> to vector<8x32xf32>
    %18 = arith.addf %15, %17 : vector<8x32xf32>
    %19 = vector.extract_strided_slice %8 {offsets = [0, 0], sizes = [8, 8], strides = [1, 1]} : vector<8x32xf32> to vector<8x8xf32>
    %20 = vector.extract_strided_slice %8 {offsets = [0, 8], sizes = [8, 8], strides = [1, 1]} : vector<8x32xf32> to vector<8x8xf32>
    %21 = vector.extract_strided_slice %8 {offsets = [0, 16], sizes = [8, 8], strides = [1, 1]} : vector<8x32xf32> to vector<8x8xf32>
    %22 = vector.extract_strided_slice %8 {offsets = [0, 24], sizes = [8, 8], strides = [1, 1]} : vector<8x32xf32> to vector<8x8xf32>
    %23 = vector.shape_cast %19 : vector<8x8xf32> to vector<1x8x8xf32>
    %24 = vector.shape_cast %20 : vector<8x8xf32> to vector<1x8x8xf32>
    %25 = vector.shape_cast %21 : vector<8x8xf32> to vector<1x8x8xf32>
    %26 = vector.shape_cast %22 : vector<8x8xf32> to vector<1x8x8xf32>
    %27 = tpu.concatenate %23, %24, %25, %26 in 0 : vector<1x8x8xf32>, vector<1x8x8xf32>, vector<1x8x8xf32>, vector<1x8x8xf32> -> vector<4x8x8xf32>
    %28 = vector.extract_strided_slice %13 {offsets = [0, 0], sizes = [8, 8], strides = [1, 1]} : vector<8x32xf32> to vector<8x8xf32>
    %29 = vector.extract_strided_slice %13 {offsets = [0, 8], sizes = [8, 8], strides = [1, 1]} : vector<8x32xf32> to vector<8x8xf32>
    %30 = vector.extract_strided_slice %13 {offsets = [0, 16], sizes = [8, 8], strides = [1, 1]} : vector<8x32xf32> to vector<8x8xf32>
    %31 = vector.extract_strided_slice %13 {offsets = [0, 24], sizes = [8, 8], strides = [1, 1]} : vector<8x32xf32> to vector<8x8xf32>
    %32 = vector.shape_cast %28 : vector<8x8xf32> to vector<1x8x8xf32>
    %33 = vector.shape_cast %29 : vector<8x8xf32> to vector<1x8x8xf32>
    %34 = vector.shape_cast %30 : vector<8x8xf32> to vector<1x8x8xf32>
    %35 = vector.shape_cast %31 : vector<8x8xf32> to vector<1x8x8xf32>
    %36 = tpu.concatenate %32, %33, %34, %35 in 0 : vector<1x8x8xf32>, vector<1x8x8xf32>, vector<1x8x8xf32>, vector<1x8x8xf32> -> vector<4x8x8xf32>
    %37 = vector.extract_strided_slice %18 {offsets = [0, 0], sizes = [8, 8], strides = [1, 1]} : vector<8x32xf32> to vector<8x8xf32>
    %38 = vector.extract_strided_slice %18 {offsets = [0, 8], sizes = [8, 8], strides = [1, 1]} : vector<8x32xf32> to vector<8x8xf32>
    %39 = vector.extract_strided_slice %18 {offsets = [0, 16], sizes = [8, 8], strides = [1, 1]} : vector<8x32xf32> to vector<8x8xf32>
    %40 = vector.extract_strided_slice %18 {offsets = [0, 24], sizes = [8, 8], strides = [1, 1]} : vector<8x32xf32> to vector<8x8xf32>
    %41 = vector.shape_cast %37 : vector<8x8xf32> to vector<1x8x8xf32>
    %42 = vector.shape_cast %38 : vector<8x8xf32> to vector<1x8x8xf32>
    %43 = vector.shape_cast %39 : vector<8x8xf32> to vector<1x8x8xf32>
    %44 = vector.shape_cast %40 : vector<8x8xf32> to vector<1x8x8xf32>
    %45 = tpu.concatenate %41, %42, %43, %44 in 0 : vector<1x8x8xf32>, vector<1x8x8xf32>, vector<1x8x8xf32>, vector<1x8x8xf32> -> vector<4x8x8xf32>
    "tpu.trace_start"() <{level = 10 : i32, message = "hqe,hke->hqk"}> : () -> ()
    %cst_19 = arith.constant dense<0.000000e+00> : vector<4x8x8xf32>
    %46 = tpu.matmul %27, %36, %cst_19 {dimension_numbers = #tpu.dot_dimension_numbers<[2], [2], [1], [1], [0, 0, 0, 1, 1, 1], [0], [0]>} : vector<4x8x8xf32>, vector<4x8x8xf32>, vector<4x8x8xf32> -> vector<4x8x8xf32>
    "tpu.trace_stop"() : () -> ()
    %cst_20 = arith.constant 0.353553385 : f32
    %47 = vector.broadcast %cst_20 : f32 to vector<4x8x8xf32>
    %48 = arith.mulf %46, %47 : vector<4x8x8xf32>
    %c0_21 = arith.constant 0 : index
    %c0_22 = arith.constant 0 : index
    %c0_23 = arith.constant 0 : index
    %49 = vector.load %arg4[%c0_21, %c0_22, %c0_23] : memref<1x1x8xf32, #tpu.memory_space<vmem>>, vector<1x1x8xf32>
    %50 = vector.shape_cast %49 : vector<1x1x8xf32> to vector<1x8xf32>
    %cst_24 = arith.constant -1.000000e+09 : f32
    %51 = vector.broadcast %cst_24 : f32 to vector<1x8xf32>
    %52 = arith.mulf %50, %51 : vector<1x8xf32>
    %53 = vector.shape_cast %52 : vector<1x8xf32> to vector<1x1x8xf32>
    %54 = vector.broadcast %53 : vector<1x1x8xf32> to vector<4x8x8xf32>
    %55 = arith.addf %48, %54 : vector<4x8x8xf32>
    %cst_25 = arith.constant dense<0xFF800000> : vector<4x8xf32>
    %56 = vector.multi_reduction <maximumf>, %55, %cst_25 [2] : vector<4x8x8xf32> to vector<4x8xf32>
    %57 = vector.shape_cast %56 : vector<4x8xf32> to vector<4x8x1xf32>
    %58 = vector.broadcast %57 : vector<4x8x1xf32> to vector<4x8x8xf32>
    %59 = arith.subf %55, %58 : vector<4x8x8xf32>
    %60 = math.exp %59 : vector<4x8x8xf32>
    %cst_26 = arith.constant dense<0.000000e+00> : vector<4x8xf32>
    %61 = vector.multi_reduction <add>, %60, %cst_26 [2] : vector<4x8x8xf32> to vector<4x8xf32>
    %62 = vector.shape_cast %61 : vector<4x8xf32> to vector<4x8x1xf32>
    %63 = tpu.reciprocal %62 {approx = true} : vector<4x8x1xf32> -> vector<4x8x1xf32>
    %64 = vector.broadcast %63 : vector<4x8x1xf32> to vector<4x8x8xf32>
    %65 = arith.mulf %60, %64 : vector<4x8x8xf32>
    "tpu.trace_start"() <{level = 10 : i32, message = "hqk,hke->hqe"}> : () -> ()
    %cst_27 = arith.constant dense<0.000000e+00> : vector<4x8x8xf32>
    %66 = tpu.matmul %65, %45, %cst_27 {dimension_numbers = #tpu.dot_dimension_numbers<[2], [1], [1], [2], [0, 0, 0, 1, 1, 2], [0], [0]>} : vector<4x8x8xf32>, vector<4x8x8xf32>, vector<4x8x8xf32> -> vector<4x8x8xf32>
    "tpu.trace_stop"() : () -> ()
    %c0_28 = arith.constant 0 : index
    %c0_29 = arith.constant 0 : index
    %c0_30 = arith.constant 0 : index
    %67 = vector.load %arg11[%c0_28, %c0_29, %c0_30] : memref<4x8x32xf32, #tpu.memory_space<vmem>>, vector<4x8x32xf32>
    "tpu.trace_start"() <{level = 10 : i32, message = "hqe,hed->hqd"}> : () -> ()
    %cst_31 = arith.constant dense<0.000000e+00> : vector<4x8x32xf32>
    %68 = tpu.matmul %66, %67, %cst_31 {dimension_numbers = #tpu.dot_dimension_numbers<[2], [1], [1], [2], [0, 0, 0, 1, 1, 2], [0], [0]>} : vector<4x8x8xf32>, vector<4x8x32xf32>, vector<4x8x32xf32> -> vector<4x8x32xf32>
    "tpu.trace_stop"() : () -> ()
    %cst_32 = arith.constant dense<0.000000e+00> : vector<8x32xf32>
    %69 = vector.multi_reduction <add>, %68, %cst_32 [0] : vector<4x8x32xf32> to vector<8x32xf32>
    %c0_33 = arith.constant 0 : index
    %c0_34 = arith.constant 0 : index
    %70 = vector.load %arg12[%c0_33, %c0_34] : memref<1x32xf32, #tpu.memory_space<vmem>>, vector<1x32xf32>
    %71 = vector.broadcast %70 : vector<1x32xf32> to vector<8x32xf32>
    %72 = arith.addf %69, %71 : vector<8x32xf32>
    %73 = arith.addf %1, %72 : vector<8x32xf32>
    %cst_35 = arith.constant dense<0.000000e+00> : vector<8xf32>
    %74 = vector.multi_reduction <add>, %73, %cst_35 [1] : vector<8x32xf32> to vector<8xf32>
    %75 = vector.shape_cast %74 : vector<8xf32> to vector<8x1xf32>
    %cst_36 = arith.constant 3.200000e+01 : f32
    %76 = vector.broadcast %cst_36 : f32 to vector<8x1xf32>
    %77 = arith.divf %75, %76 : vector<8x1xf32>
    %78 = vector.broadcast %77 : vector<8x1xf32> to vector<8x32xf32>
    %79 = arith.subf %73, %78 : vector<8x32xf32>
    %80 = arith.mulf %79, %79 : vector<8x32xf32>
    %cst_37 = arith.constant dense<0.000000e+00> : vector<8xf32>
    %81 = vector.multi_reduction <add>, %80, %cst_37 [1] : vector<8x32xf32> to vector<8xf32>
    %82 = vector.shape_cast %81 : vector<8xf32> to vector<8x1xf32>
    %cst_38 = arith.constant 3.200000e+01 : f32
    %83 = vector.broadcast %cst_38 : f32 to vector<8x1xf32>
    %84 = arith.divf %82, %83 : vector<8x1xf32>
    %85 = vector.broadcast %77 : vector<8x1xf32> to vector<8x32xf32>
    %86 = arith.subf %73, %85 : vector<8x32xf32>
    %cst_39 = arith.constant 9.99999997E-7 : f32
    %87 = vector.broadcast %cst_39 : f32 to vector<8x1xf32>
    %88 = arith.addf %84, %87 : vector<8x1xf32>
    %89 = math.rsqrt %88 : vector<8x1xf32>
    %90 = vector.broadcast %89 : vector<8x1xf32> to vector<8x32xf32>
    %91 = arith.mulf %86, %90 : vector<8x32xf32>
    %c0_40 = arith.constant 0 : index
    %c0_41 = arith.constant 0 : index
    %92 = vector.load %arg13[%c0_40, %c0_41] : memref<1x32xf32, #tpu.memory_space<vmem>>, vector<1x32xf32>
    %93 = vector.broadcast %92 : vector<1x32xf32> to vector<8x32xf32>
    %94 = arith.mulf %91, %93 : vector<8x32xf32>
    %c0_42 = arith.constant 0 : index
    %c0_43 = arith.constant 0 : index
    %95 = vector.load %arg14[%c0_42, %c0_43] : memref<1x32xf32, #tpu.memory_space<vmem>>, vector<1x32xf32>
    %96 = vector.broadcast %95 : vector<1x32xf32> to vector<8x32xf32>
    %97 = arith.addf %94, %96 : vector<8x32xf32>
    %c0_44 = arith.constant 0 : index
    %c0_45 = arith.constant 0 : index
    %98 = vector.load %arg15[%c0_44, %c0_45] : memref<32x64xf32, #tpu.memory_space<vmem>>, vector<32x64xf32>
    %cst_46 = arith.constant dense<0.000000e+00> : vector<8x64xf32>
    %99 = tpu.matmul %97, %98, %cst_46 {dimension_numbers = #tpu.dot_dimension_numbers<[1], [0], [0], [1], [0, 0, 1, 1], [], []>} : vector<8x32xf32>, vector<32x64xf32>, vector<8x64xf32> -> vector<8x64xf32>
    %c0_47 = arith.constant 0 : index
    %c0_48 = arith.constant 0 : index
    %100 = vector.load %arg16[%c0_47, %c0_48] : memref<1x64xf32, #tpu.memory_space<vmem>>, vector<1x64xf32>
    %101 = vector.broadcast %100 : vector<1x64xf32> to vector<8x64xf32>
    %102 = arith.addf %99, %101 : vector<8x64xf32>
    %cst_49 = arith.constant 0.000000e+00 : f32
    %103 = vector.broadcast %cst_49 : f32 to vector<8x64xf32>
    %104 = arith.maximumf %102, %103 : vector<8x64xf32>
    %c0_50 = arith.constant 0 : index
    %c0_51 = arith.constant 0 : index
    %105 = vector.load %arg17[%c0_50, %c0_51] : memref<64x32xf32, #tpu.memory_space<vmem>>, vector<64x32xf32>
    %cst_52 = arith.constant dense<0.000000e+00> : vector<8x32xf32>
    %106 = tpu.matmul %104, %105, %cst_52 {dimension_numbers = #tpu.dot_dimension_numbers<[1], [0], [0], [1], [0, 0, 1, 1], [], []>} : vector<8x64xf32>, vector<64x32xf32>, vector<8x32xf32> -> vector<8x32xf32>
    %c0_53 = arith.constant 0 : index
    %c0_54 = arith.constant 0 : index
    %107 = vector.load %arg18[%c0_53, %c0_54] : memref<1x32xf32, #tpu.memory_space<vmem>>, vector<1x32xf32>
    %108 = vector.broadcast %107 : vector<1x32xf32> to vector<8x32xf32>
    %109 = arith.addf %106, %108 : vector<8x32xf32>
    %110 = arith.addf %97, %109 : vector<8x32xf32>
    %cst_55 = arith.constant dense<0.000000e+00> : vector<8xf32>
    %111 = vector.multi_reduction <add>, %110, %cst_55 [1] : vector<8x32xf32> to vector<8xf32>
    %112 = vector.shape_cast %111 : vector<8xf32> to vector<8x1xf32>
    %cst_56 = arith.constant 3.200000e+01 : f32
    %113 = vector.broadcast %cst_56 : f32 to vector<8x1xf32>
    %114 = arith.divf %112, %113 : vector<8x1xf32>
    %115 = vector.broadcast %114 : vector<8x1xf32> to vector<8x32xf32>
    %116 = arith.subf %110, %115 : vector<8x32xf32>
    %117 = arith.mulf %116, %116 : vector<8x32xf32>
    %cst_57 = arith.constant dense<0.000000e+00> : vector<8xf32>
    %118 = vector.multi_reduction <add>, %117, %cst_57 [1] : vector<8x32xf32> to vector<8xf32>
    %119 = vector.shape_cast %118 : vector<8xf32> to vector<8x1xf32>
    %cst_58 = arith.constant 3.200000e+01 : f32
    %120 = vector.broadcast %cst_58 : f32 to vector<8x1xf32>
    %121 = arith.divf %119, %120 : vector<8x1xf32>
    %122 = vector.broadcast %114 : vector<8x1xf32> to vector<8x32xf32>
    %123 = arith.subf %110, %122 : vector<8x32xf32>
    %cst_59 = arith.constant 9.99999997E-7 : f32
    %124 = vector.broadcast %cst_59 : f32 to vector<8x1xf32>
    %125 = arith.addf %121, %124 : vector<8x1xf32>
    %126 = math.rsqrt %125 : vector<8x1xf32>
    %127 = vector.broadcast %126 : vector<8x1xf32> to vector<8x32xf32>
    %128 = arith.mulf %123, %127 : vector<8x32xf32>
    %c0_60 = arith.constant 0 : index
    %c0_61 = arith.constant 0 : index
    %129 = vector.load %arg19[%c0_60, %c0_61] : memref<1x32xf32, #tpu.memory_space<vmem>>, vector<1x32xf32>
    %130 = vector.broadcast %129 : vector<1x32xf32> to vector<8x32xf32>
    %131 = arith.mulf %128, %130 : vector<8x32xf32>
    %c0_62 = arith.constant 0 : index
    %c0_63 = arith.constant 0 : index
    %132 = vector.load %arg20[%c0_62, %c0_63] : memref<1x32xf32, #tpu.memory_space<vmem>>, vector<1x32xf32>
    %133 = vector.broadcast %132 : vector<1x32xf32> to vector<8x32xf32>
    %134 = arith.addf %131, %133 : vector<8x32xf32>
    %c0_64 = arith.constant 0 : index
    %c0_65 = arith.constant 0 : index
    %c0_66 = arith.constant 0 : index
    %135 = vector.load %arg21[%c0_64, %c0_65, %c0_66] : memref<1x8x32xf32, #tpu.memory_space<vmem>>, vector<1x8x32xf32>
    %136 = vector.shape_cast %135 : vector<1x8x32xf32> to vector<8x32xf32>
    %137 = vector.shape_cast %134 : vector<8x32xf32> to vector<1x8x32xf32>
    tpu.vector_store %arg21[%c0_64, %c0_65, %c0_66], %137 {strides = array<i32>} : memref<1x8x32xf32, #tpu.memory_space<vmem>>, vector<1x8x32xf32>,
    return
  }
  func.func @transform_0(%arg0: i32, %arg1: i32) -> (i32, i32, i32) {
    %c0_i32 = arith.constant 0 : i32
    %c0_i32_0 = arith.constant 0 : i32
    return %arg0, %arg1, %c0_i32 : i32, i32, i32
  }
  func.func @transform_1(%arg0: i32, %arg1: i32) -> (i32, i32, i32) {
    %c0_i32 = arith.constant 0 : i32
    %c0_i32_0 = arith.constant 0 : i32
    %c0_i32_1 = arith.constant 0 : i32
    return %arg0, %c0_i32, %c0_i32_0 : i32, i32, i32
  }
  func.func @transform_2(%arg0: i32, %arg1: i32) -> (i32, i32, i32) {
    %c0_i32 = arith.constant 0 : i32
    %c0_i32_0 = arith.constant 0 : i32
    %c0_i32_1 = arith.constant 0 : i32
    return %arg0, %c0_i32, %c0_i32_0 : i32, i32, i32
  }
  func.func @transform_3(%arg0: i32, %arg1: i32) -> (i32, i32) {
    %c0_i32 = arith.constant 0 : i32
    %c0_i32_0 = arith.constant 0 : i32
    %c0_i32_1 = arith.constant 0 : i32
    return %c0_i32, %c0_i32_0 : i32, i32
  }
  func.func @transform_4(%arg0: i32, %arg1: i32) -> (i32, i32) {
    %c0_i32 = arith.constant 0 : i32
    %c0_i32_0 = arith.constant 0 : i32
    %c0_i32_1 = arith.constant 0 : i32
    return %c0_i32, %c0_i32_0 : i32, i32
  }
  func.func @transform_5(%arg0: i32, %arg1: i32) -> (i32, i32) {
    %c0_i32 = arith.constant 0 : i32
    %c0_i32_0 = arith.constant 0 : i32
    %c0_i32_1 = arith.constant 0 : i32
    return %c0_i32, %c0_i32_0 : i32, i32
  }
  func.func @transform_6(%arg0: i32, %arg1: i32) -> (i32, i32) {
    %c0_i32 = arith.constant 0 : i32
    %c0_i32_0 = arith.constant 0 : i32
    %c0_i32_1 = arith.constant 0 : i32
    return %c0_i32, %c0_i32_0 : i32, i32
  }
  func.func @transform_7(%arg0: i32, %arg1: i32) -> (i32, i32) {
    %c0_i32 = arith.constant 0 : i32
    %c0_i32_0 = arith.constant 0 : i32
    %c0_i32_1 = arith.constant 0 : i32
    return %c0_i32, %c0_i32_0 : i32, i32
  }
  func.func @transform_8(%arg0: i32, %arg1: i32) -> (i32, i32) {
    %c0_i32 = arith.constant 0 : i32
    %c0_i32_0 = arith.constant 0 : i32
    %c0_i32_1 = arith.constant 0 : i32
    return %c0_i32, %c0_i32_0 : i32, i32
  }
  func.func @transform_9(%arg0: i32, %arg1: i32) -> (i32, i32, i32) {
    %c0_i32 = arith.constant 0 : i32
    %c0_i32_0 = arith.constant 0 : i32
    %c0_i32_1 = arith.constant 0 : i32
    %c0_i32_2 = arith.constant 0 : i32
    return %c0_i32, %c0_i32_0, %c0_i32_1 : i32, i32, i32
  }
  func.func @transform_10(%arg0: i32, %arg1: i32) -> (i32, i32) {
    %c0_i32 = arith.constant 0 : i32
    %c0_i32_0 = arith.constant 0 : i32
    %c0_i32_1 = arith.constant 0 : i32
    return %c0_i32, %c0_i32_0 : i32, i32
  }
  func.func @transform_11(%arg0: i32, %arg1: i32) -> (i32, i32) {
    %c0_i32 = arith.constant 0 : i32
    %c0_i32_0 = arith.constant 0 : i32
    %c0_i32_1 = arith.constant 0 : i32
    return %c0_i32, %c0_i32_0 : i32, i32
  }
  func.func @transform_12(%arg0: i32, %arg1: i32) -> (i32, i32) {
    %c0_i32 = arith.constant 0 : i32
    %c0_i32_0 = arith.constant 0 : i32
    %c0_i32_1 = arith.constant 0 : i32
    return %c0_i32, %c0_i32_0 : i32, i32
  }
  func.func @transform_13(%arg0: i32, %arg1: i32) -> (i32, i32) {
    %c0_i32 = arith.constant 0 : i32
    %c0_i32_0 = arith.constant 0 : i32
    %c0_i32_1 = arith.constant 0 : i32
    return %c0_i32, %c0_i32_0 : i32, i32
  }
  func.func @transform_14(%arg0: i32, %arg1: i32) -> (i32, i32) {
    %c0_i32 = arith.constant 0 : i32
    %c0_i32_0 = arith.constant 0 : i32
    %c0_i32_1 = arith.constant 0 : i32
    return %c0_i32, %c0_i32_0 : i32, i32
  }
  func.func @transform_15(%arg0: i32, %arg1: i32) -> (i32, i32) {
    %c0_i32 = arith.constant 0 : i32
    %c0_i32_0 = arith.constant 0 : i32
    %c0_i32_1 = arith.constant 0 : i32
    return %c0_i32, %c0_i32_0 : i32, i32
  }
  func.func @transform_16(%arg0: i32, %arg1: i32) -> (i32, i32) {
    %c0_i32 = arith.constant 0 : i32
    %c0_i32_0 = arith.constant 0 : i32
    %c0_i32_1 = arith.constant 0 : i32
    return %c0_i32, %c0_i32_0 : i32, i32
  }
  func.func @transform_17(%arg0: i32, %arg1: i32) -> (i32, i32) {
    %c0_i32 = arith.constant 0 : i32
    %c0_i32_0 = arith.constant 0 : i32
    %c0_i32_1 = arith.constant 0 : i32
    return %c0_i32, %c0_i32_0 : i32, i32
  }
  func.func @transform_18(%arg0: i32, %arg1: i32) -> (i32, i32) {
    %c0_i32 = arith.constant 0 : i32
    %c0_i32_0 = arith.constant 0 : i32
    %c0_i32_1 = arith.constant 0 : i32
    return %c0_i32, %c0_i32_0 : i32, i32
  }
  func.func @transform_19(%arg0: i32, %arg1: i32) -> (i32, i32, i32) {
    %c0_i32 = arith.constant 0 : i32
    %c0_i32_0 = arith.constant 0 : i32
    return %arg0, %arg1, %c0_i32 : i32, i32, i32
  }
}

</mosaic_0001>

<llo_original>
// kernel: tpu_custom_call.1
$region0: #{tpu_custom_call.1}
  #allocation0 [shape = 'u32[]', space=smem, size = 0x4, offset = 0x4, fixed_abs, tag = 'smem constant byte address 0x4 - core index']
  #allocation1 [shape = 'u32[144,128]{1,0:T(1,128)}', space=vmem, size = 0x12000, scoped, tag = 'internal scratch']
  %s0 = inlined_call_operand.hbm [shape: f32[2,8,32], index: 0, kind: input, shape index: {}]
  %s1 = inlined_call_operand.hbm [shape: f32[2,8,32], index: 1, kind: input, shape index: {}]
  %s2 = inlined_call_operand.vmem [shape: f32[2,1,8], index: 2, kind: input, shape index: {}]
  %s3 = inlined_call_operand.vmem [shape: f32[32,32], index: 3, kind: input, shape index: {}]
  %s4 = inlined_call_operand.vmem [shape: f32[1,32], index: 4, kind: input, shape index: {}]
  %s5 = inlined_call_operand.vmem [shape: f32[32,32], index: 5, kind: input, shape index: {}]
  %s6 = inlined_call_operand.vmem [shape: f32[1,32], index: 6, kind: input, shape index: {}]
  %s7 = inlined_call_operand.vmem [shape: f32[32,32], index: 7, kind: input, shape index: {}]
  %s8 = inlined_call_operand.vmem [shape: f32[1,32], index: 8, kind: input, shape index: {}]
  %s9 = inlined_call_operand.hbm [shape: f32[4,8,32], index: 9, kind: input, shape index: {}]
  %s10 = inlined_call_operand.vmem [shape: f32[1,32], index: 10, kind: input, shape index: {}]
  %s11 = inlined_call_operand.vmem [shape: f32[1,32], index: 11, kind: input, shape index: {}]
  %s12 = inlined_call_operand.vmem [shape: f32[1,32], index: 12, kind: input, shape index: {}]
  %s13 = inlined_call_operand.hbm [shape: f32[32,64], index: 13, kind: input, shape index: {}]
  %s14 = inlined_call_operand.vmem [shape: f32[1,64], index: 14, kind: input, shape index: {}]
  %s15 = inlined_call_operand.vmem [shape: f32[64,32], index: 15, kind: input, shape index: {}]
  %s16 = inlined_call_operand.vmem [shape: f32[1,32], index: 16, kind: input, shape index: {}]
  %s17 = inlined_call_operand.vmem [shape: f32[1,32], index: 17, kind: input, shape index: {}]
  %s18 = inlined_call_operand.vmem [shape: f32[1,32], index: 18, kind: input, shape index: {}]
  %s19 = inlined_call_operand.hbm [shape: f32[2,8,32], index: 19, kind: output, shape index: {}]
  %s20 = sld [smem:[#allocation0]]
  $region125: #{tpu_custom_call.1} parent=0
    _
  %s22 = ssub.s32 1, %s20
  %s23 = scalar_select 0, %s22, %s20
  $region1: #{tpu_custom_call.1} parent=0
    #allocation2 [shape = 'u8[8192]{0}', space=vmem, size = 0x2000, scoped, tag = 'input window, operand 0']
    #allocation3 [shape = 's32[2]{0}', space=sflag, size = 0x8, scoped, tag = 'scoped memory for tpu_custom_call.1']
    #allocation4 [shape = 's32[2]{0}', space=sflag, size = 0x8, scoped, tag = 'scoped memory for tpu_custom_call.1']
    #allocation5 [shape = 'u8[8192]{0}', space=vmem, size = 0x2000, scoped, tag = 'input window, operand 1']
    #allocation6 [shape = 's32[2]{0}', space=sflag, size = 0x8, scoped, tag = 'scoped memory for tpu_custom_call.1']
    #allocation7 [shape = 'u8[16384]{0}', space=vmem, size = 0x4000, scoped, tag = 'input window, operand 9, single buffered']
    #allocation8 [shape = 'u8[16384]{0}', space=vmem, size = 0x4000, scoped, tag = 'input window, operand 13, single buffered']
    #allocation9 [shape = 's32[1]{0}', space=sflag, size = 0x4, scoped, tag = 'scoped memory for tpu_custom_call.1']
    #allocation10 [shape = 'u8[8192]{0}', space=vmem, size = 0x2000, scoped, tag = 'output window, operand 0']
    %24 = vsyncpa [#allocation3], 0
    %s25 = scalar_lea.sflag [#allocation3], 1
    %26 = vsyncpa %s25, 0
    %27 = vsyncpa [#allocation6], 0
    %s28 = scalar_lea.sflag [#allocation6], 1
    %29 = vsyncpa %s28, 0
    %30 = vsyncpa [#allocation9], 0
    %31 = vsyncpa [#allocation4], 0
    %s32 = scalar_lea.sflag [#allocation4], 1
    %33 = vsyncpa %s32, 0
    loop: start=0, step=1, limit=4
    $region2: #{tpu_custom_call.1} parent=1 // loop_pre_header
      _
    $region3: #{tpu_custom_call.1} parent=1 // loop_header
      %s35 = sphi 0, %s39
      %p36 = scmp.ge.s32.totalorder %s35, 4
      %s42 = sphi 0, %s54
      %s43 = sphi 0, %s50
      %s44 = sphi 0, %s42
      %s45 = sphi 0, %s43
      %s46 = sphi 0, %s44
      %s47 = sphi 0, %s45
      %s59 = sphi 0, %s61
      %s62 = sphi 0, %s59
      %s63 = sphi 0, %s62
      %s79 = sphi 0, %s63
      %s85 = sphi 0, %s87
      %s88 = sphi 0, %s85
      %s89 = sphi 0, %s88
      %s105 = sphi 0, %s89
      %s111 = sphi 0, %s113
      %s114 = sphi 0, %s111
      %s115 = sphi 0, %s114
      %s131 = sphi 0, %s115
      %s135 = sphi 0, %s135
      %s137 = sphi 0, %s135
      %s138 = sphi 0, %s137
      %s152 = sphi 0, %s138
      %s156 = sphi 0, %s156
      %s158 = sphi 0, %s156
      %s159 = sphi 0, %s158
      %s173 = sphi 0, %s159
      %s177 = sphi 0, %s177
      %s179 = sphi 0, %s177
      %s180 = sphi 0, %s179
      %s194 = sphi 0, %s180
      %s198 = sphi 0, %s198
      %s200 = sphi 0, %s198
      %s201 = sphi 0, %s200
      %s215 = sphi 0, %s201
      %s219 = sphi 0, %s219
      %s221 = sphi 0, %s219
      %s222 = sphi 0, %s221
      %s236 = sphi 0, %s222
      %s240 = sphi 0, %s240
      %s242 = sphi 0, %s240
      %s243 = sphi 0, %s242
      %s257 = sphi 0, %s243
      %s261 = sphi 0, %s261
      %s263 = sphi 0, %s261
      %s264 = sphi 0, %s263
      %s278 = sphi 0, %s264
      %s282 = sphi 0, %s282
      %s284 = sphi 0, %s282
      %s285 = sphi 0, %s284
      %s299 = sphi 0, %s285
      %s303 = sphi 0, %s303
      %s305 = sphi 0, %s303
      %s306 = sphi 0, %s305
      %s320 = sphi 0, %s306
      %s324 = sphi 0, %s324
      %s326 = sphi 0, %s324
      %s327 = sphi 0, %s326
      %s341 = sphi 0, %s327
      %s345 = sphi 0, %s345
      %s347 = sphi 0, %s345
      %s348 = sphi 0, %s347
      %s362 = sphi 0, %s348
      %s366 = sphi 0, %s366
      %s368 = sphi 0, %s366
      %s369 = sphi 0, %s368
      %s383 = sphi 0, %s369
      %s387 = sphi 0, %s387
      %s389 = sphi 0, %s387
      %s390 = sphi 0, %s389
      %s404 = sphi 0, %s390
      %s408 = sphi 0, %s408
      %s410 = sphi 0, %s408
      %s411 = sphi 0, %s410
      %s425 = sphi 0, %s411
      %s429 = sphi 0, %s429
      %s431 = sphi 0, %s429
      %s432 = sphi 0, %s431
      %s446 = sphi 0, %s432
      %s450 = sphi 0, %s450
      %s452 = sphi 0, %s450
      %s453 = sphi 0, %s452
      %s467 = sphi 0, %s453
      %s475 = sphi 0, %s477
      %s478 = sphi 0, %s475
      %s479 = sphi 0, %s478
      %s495 = sphi 0, %s479
    $region4: #{tpu_custom_call.1} parent=1 // loop_header_branch
      %38 = sbr.rel (%p36) target = $region8
    $region5: #{tpu_custom_call.1} parent=1 // loop_body
      %s40 = ssub.s32 %s35, 1
      %s41 = ssub.s32 %s35, 2
      %s48 = sadd.s32 1, %s43
      %p49 = scmp.ge.s32.totalorder %s48, 1
      %s50 = scalar_select %p49, 0, %s48
      %s51 = sadd.s32 1, %s42
      %s52 = scalar_select %p49, %s51, %s42
      %p53 = scmp.ge.s32.totalorder %s52, 2
      %s54 = scalar_select %p53, 0, %s52
      %s55 = ssub.s32 %s42, %s54
      %s56 = ssub.s32 %s43, %s50
      %s57 = sor.u32 %s55, %s56
      %p58 = scmp.eq.s32.totalorder %s57, 0
      %s60 = sadd.s32 %s59, 1
      %s61 = scalar_select %p58, %s59, %s60
      %p64 = pneg %p58
      %p65 = scmp.eq.s32.totalorder %s35, 1
      %p66 = por %p64, %p65
      %p67 = scmp.ne.s32.totalorder %s59, %s62
      %p68 = scmp.eq.s32.totalorder %s35, 0
      %p69 = por %p67, %p68
      %p70 = scmp.ne.s32.totalorder %s59, %s62
      %p71 = scmp.eq.s32.totalorder %s40, 1
      %p72 = por %p70, %p71
      %p73 = scmp.ne.s32.totalorder %s62, %s63
      %p74 = scmp.eq.s32.totalorder %s40, 0
      %p75 = por %p73, %p74
      %p76 = scmp.ne.s32.totalorder %s62, %s63
      %p77 = scmp.eq.s32.totalorder %s41, 1
      %p78 = por %p76, %p77
      %p80 = scmp.ne.s32.totalorder %s63, %s79
      %p81 = scmp.eq.s32.totalorder %s41, 0
      %p82 = por %p80, %p81
      %s83 = ssub.s32 %s42, %s54
      %p84 = scmp.eq.s32.totalorder %s83, 0
      %s86 = sadd.s32 %s85, 1
      %s87 = scalar_select %p84, %s85, %s86
      %p90 = pneg %p84
      %p91 = scmp.eq.s32.totalorder %s35, 1
      %p92 = por %p90, %p91
      %p93 = scmp.ne.s32.totalorder %s85, %s88
      %p94 = scmp.eq.s32.totalorder %s35, 0
      %p95 = por %p93, %p94
      %p96 = scmp.ne.s32.totalorder %s85, %s88
      %p97 = scmp.eq.s32.totalorder %s40, 1
      %p98 = por %p96, %p97
      %p99 = scmp.ne.s32.totalorder %s88, %s89
      %p100 = scmp.eq.s32.totalorder %s40, 0
      %p101 = por %p99, %p100
      %p102 = scmp.ne.s32.totalorder %s88, %s89
      %p103 = scmp.eq.s32.totalorder %s41, 1
      %p104 = por %p102, %p103
      %p106 = scmp.ne.s32.totalorder %s89, %s105
      %p107 = scmp.eq.s32.totalorder %s41, 0
      %p108 = por %p106, %p107
      %s109 = ssub.s32 %s42, %s54
      %p110 = scmp.eq.s32.totalorder %s109, 0
      %s112 = sadd.s32 %s111, 1
      %s113 = scalar_select %p110, %s111, %s112
      %p116 = pneg %p110
      %p117 = scmp.eq.s32.totalorder %s35, 1
      %p118 = por %p116, %p117
      %p119 = scmp.ne.s32.totalorder %s111, %s114
      %p120 = scmp.eq.s32.totalorder %s35, 0
      %p121 = por %p119, %p120
      %p122 = scmp.ne.s32.totalorder %s111, %s114
      %p123 = scmp.eq.s32.totalorder %s40, 1
      %p124 = por %p122, %p123
      %p125 = scmp.ne.s32.totalorder %s114, %s115
      %p126 = scmp.eq.s32.totalorder %s40, 0
      %p127 = por %p125, %p126
      %p128 = scmp.ne.s32.totalorder %s114, %s115
      %p129 = scmp.eq.s32.totalorder %s41, 1
      %p130 = por %p128, %p129
      %p132 = scmp.ne.s32.totalorder %s115, %s131
      %p133 = scmp.eq.s32.totalorder %s41, 0
      %p134 = por %p132, %p133
      %s136 = sadd.s32 %s135, 1
      %p139 = scmp.eq.s32.totalorder %s35, 1
      %p140 = scmp.ne.s32.totalorder %s135, %s137
      %p141 = scmp.eq.s32.totalorder %s35, 0
      %p142 = por %p140, %p141
      %p143 = scmp.ne.s32.totalorder %s135, %s137
      %p144 = scmp.eq.s32.totalorder %s40, 1
      %p145 = por %p143, %p144
      %p146 = scmp.ne.s32.totalorder %s137, %s138
      %p147 = scmp.eq.s32.totalorder %s40, 0
      %p148 = por %p146, %p147
      %p149 = scmp.ne.s32.totalorder %s137, %s138
      %p150 = scmp.eq.s32.totalorder %s41, 1
      %p151 = por %p149, %p150
      %p153 = scmp.ne.s32.totalorder %s138, %s152
      %p154 = scmp.eq.s32.totalorder %s41, 0
      %p155 = por %p153, %p154
      %s157 = sadd.s32 %s156, 1
      %p160 = scmp.eq.s32.totalorder %s35, 1
      %p161 = scmp.ne.s32.totalorder %s156, %s158
      %p162 = scmp.eq.s32.totalorder %s35, 0
      %p163 = por %p161, %p162
      %p164 = scmp.ne.s32.totalorder %s156, %s158
      %p165 = scmp.eq.s32.totalorder %s40, 1
      %p166 = por %p164, %p165
      %p167 = scmp.ne.s32.totalorder %s158, %s159
      %p168 = scmp.eq.s32.totalorder %s40, 0
      %p169 = por %p167, %p168
      %p170 = scmp.ne.s32.totalorder %s158, %s159
      %p171 = scmp.eq.s32.totalorder %s41, 1
      %p172 = por %p170, %p171
      %p174 = scmp.ne.s32.totalorder %s159, %s173
      %p175 = scmp.eq.s32.totalorder %s41, 0
      %p176 = por %p174, %p175
      %s178 = sadd.s32 %s177, 1
      %p181 = scmp.eq.s32.totalorder %s35, 1
      %p182 = scmp.ne.s32.totalorder %s177, %s179
      %p183 = scmp.eq.s32.totalorder %s35, 0
      %p184 = por %p182, %p183
      %p185 = scmp.ne.s32.totalorder %s177, %s179
      %p186 = scmp.eq.s32.totalorder %s40, 1
      %p187 = por %p185, %p186
      %p188 = scmp.ne.s32.totalorder %s179, %s180
      %p189 = scmp.eq.s32.totalorder %s40, 0
      %p190 = por %p188, %p189
      %p191 = scmp.ne.s32.totalorder %s179, %s180
      %p192 = scmp.eq.s32.totalorder %s41, 1
      %p193 = por %p191, %p192
      %p195 = scmp.ne.s32.totalorder %s180, %s194
      %p196 = scmp.eq.s32.totalorder %s41, 0
      %p197 = por %p195, %p196
      %s199 = sadd.s32 %s198, 1
      %p202 = scmp.eq.s32.totalorder %s35, 1
      %p203 = scmp.ne.s32.totalorder %s198, %s200
      %p204 = scmp.eq.s32.totalorder %s35, 0
      %p205 = por %p203, %p204
      %p206 = scmp.ne.s32.totalorder %s198, %s200
      %p207 = scmp.eq.s32.totalorder %s40, 1
      %p208 = por %p206, %p207
      %p209 = scmp.ne.s32.totalorder %s200, %s201
      %p210 = scmp.eq.s32.totalorder %s40, 0
      %p211 = por %p209, %p210
      %p212 = scmp.ne.s32.totalorder %s200, %s201
      %p213 = scmp.eq.s32.totalorder %s41, 1
      %p214 = por %p212, %p213
      %p216 = scmp.ne.s32.totalorder %s201, %s215
      %p217 = scmp.eq.s32.totalorder %s41, 0
      %p218 = por %p216, %p217
      %s220 = sadd.s32 %s219, 1
      %p223 = scmp.eq.s32.totalorder %s35, 1
      %p224 = scmp.ne.s32.totalorder %s219, %s221
      %p225 = scmp.eq.s32.totalorder %s35, 0
      %p226 = por %p224, %p225
      %p227 = scmp.ne.s32.totalorder %s219, %s221
      %p228 = scmp.eq.s32.totalorder %s40, 1
      %p229 = por %p227, %p228
      %p230 = scmp.ne.s32.totalorder %s221, %s222
      %p231 = scmp.eq.s32.totalorder %s40, 0
      %p232 = por %p230, %p231
      %p233 = scmp.ne.s32.totalorder %s221, %s222
      %p234 = scmp.eq.s32.totalorder %s41, 1
      %p235 = por %p233, %p234
      %p237 = scmp.ne.s32.totalorder %s222, %s236
      %p238 = scmp.eq.s32.totalorder %s41, 0
      %p239 = por %p237, %p238
      %s241 = sadd.s32 %s240, 1
      %p244 = scmp.eq.s32.totalorder %s35, 1
      %p245 = scmp.ne.s32.totalorder %s240, %s242
      %p246 = scmp.eq.s32.totalorder %s35, 0
      %p247 = por %p245, %p246
      %p248 = scmp.ne.s32.totalorder %s240, %s242
      %p249 = scmp.eq.s32.totalorder %s40, 1
      %p250 = por %p248, %p249
      %p251 = scmp.ne.s32.totalorder %s242, %s243
      %p252 = scmp.eq.s32.totalorder %s40, 0
      %p253 = por %p251, %p252
      %p254 = scmp.ne.s32.totalorder %s242, %s243
      %p255 = scmp.eq.s32.totalorder %s41, 1
      %p256 = por %p254, %p255
      %p258 = scmp.ne.s32.totalorder %s243, %s257
      %p259 = scmp.eq.s32.totalorder %s41, 0
      %p260 = por %p258, %p259
      %s262 = sadd.s32 %s261, 1
      %p265 = scmp.eq.s32.totalorder %s35, 1
      %p266 = scmp.ne.s32.totalorder %s261, %s263
      %p267 = scmp.eq.s32.totalorder %s35, 0
      %p268 = por %p266, %p267
      %p269 = scmp.ne.s32.totalorder %s261, %s263
      %p270 = scmp.eq.s32.totalorder %s40, 1
      %p271 = por %p269, %p270
      %p272 = scmp.ne.s32.totalorder %s263, %s264
      %p273 = scmp.eq.s32.totalorder %s40, 0
      %p274 = por %p272, %p273
      %p275 = scmp.ne.s32.totalorder %s263, %s264
      %p276 = scmp.eq.s32.totalorder %s41, 1
      %p277 = por %p275, %p276
      %p279 = scmp.ne.s32.totalorder %s264, %s278
      %p280 = scmp.eq.s32.totalorder %s41, 0
      %p281 = por %p279, %p280
      %s283 = sadd.s32 %s282, 1
      %p286 = scmp.eq.s32.totalorder %s35, 1
      %p287 = scmp.ne.s32.totalorder %s282, %s284
      %p288 = scmp.eq.s32.totalorder %s35, 0
      %p289 = por %p287, %p288
      %p290 = scmp.ne.s32.totalorder %s282, %s284
      %p291 = scmp.eq.s32.totalorder %s40, 1
      %p292 = por %p290, %p291
      %p293 = scmp.ne.s32.totalorder %s284, %s285
      %p294 = scmp.eq.s32.totalorder %s40, 0
      %p295 = por %p293, %p294
      %p296 = scmp.ne.s32.totalorder %s284, %s285
      %p297 = scmp.eq.s32.totalorder %s41, 1
      %p298 = por %p296, %p297
      %p300 = scmp.ne.s32.totalorder %s285, %s299
      %p301 = scmp.eq.s32.totalorder %s41, 0
      %p302 = por %p300, %p301
      %s304 = sadd.s32 %s303, 1
      %p307 = scmp.eq.s32.totalorder %s35, 1
      %p308 = scmp.ne.s32.totalorder %s303, %s305
      %p309 = scmp.eq.s32.totalorder %s35, 0
      %p310 = por %p308, %p309
      %p311 = scmp.ne.s32.totalorder %s303, %s305
      %p312 = scmp.eq.s32.totalorder %s40, 1
      %p313 = por %p311, %p312
      %p314 = scmp.ne.s32.totalorder %s305, %s306
      %p315 = scmp.eq.s32.totalorder %s40, 0
      %p316 = por %p314, %p315
      %p317 = scmp.ne.s32.totalorder %s305, %s306
      %p318 = scmp.eq.s32.totalorder %s41, 1
      %p319 = por %p317, %p318
      %p321 = scmp.ne.s32.totalorder %s306, %s320
      %p322 = scmp.eq.s32.totalorder %s41, 0
      %p323 = por %p321, %p322
      %s325 = sadd.s32 %s324, 1
      %p328 = scmp.eq.s32.totalorder %s35, 1
      %p329 = scmp.ne.s32.totalorder %s324, %s326
      %p330 = scmp.eq.s32.totalorder %s35, 0
      %p331 = por %p329, %p330
      %p332 = scmp.ne.s32.totalorder %s324, %s326
      %p333 = scmp.eq.s32.totalorder %s40, 1
      %p334 = por %p332, %p333
      %p335 = scmp.ne.s32.totalorder %s326, %s327
      %p336 = scmp.eq.s32.totalorder %s40, 0
      %p337 = por %p335, %p336
      %p338 = scmp.ne.s32.totalorder %s326, %s327
      %p339 = scmp.eq.s32.totalorder %s41, 1
      %p340 = por %p338, %p339
      %p342 = scmp.ne.s32.totalorder %s327, %s341
      %p343 = scmp.eq.s32.totalorder %s41, 0
      %p344 = por %p342, %p343
      %s346 = sadd.s32 %s345, 1
      %p349 = scmp.eq.s32.totalorder %s35, 1
      %p350 = scmp.ne.s32.totalorder %s345, %s347
      %p351 = scmp.eq.s32.totalorder %s35, 0
      %p352 = por %p350, %p351
      %p353 = scmp.ne.s32.totalorder %s345, %s347
      %p354 = scmp.eq.s32.totalorder %s40, 1
      %p355 = por %p353, %p354
      %p356 = scmp.ne.s32.totalorder %s347, %s348
      %p357 = scmp.eq.s32.totalorder %s40, 0
      %p358 = por %p356, %p357
      %p359 = scmp.ne.s32.totalorder %s347, %s348
      %p360 = scmp.eq.s32.totalorder %s41, 1
      %p361 = por %p359, %p360
      %p363 = scmp.ne.s32.totalorder %s348, %s362
      %p364 = scmp.eq.s32.totalorder %s41, 0
      %p365 = por %p363, %p364
      %s367 = sadd.s32 %s366, 1
      %p370 = scmp.eq.s32.totalorder %s35, 1
      %p371 = scmp.ne.s32.totalorder %s366, %s368
      %p372 = scmp.eq.s32.totalorder %s35, 0
      %p373 = por %p371, %p372
      %p374 = scmp.ne.s32.totalorder %s366, %s368
      %p375 = scmp.eq.s32.totalorder %s40, 1
      %p376 = por %p374, %p375
      %p377 = scmp.ne.s32.totalorder %s368, %s369
      %p378 = scmp.eq.s32.totalorder %s40, 0
      %p379 = por %p377, %p378
      %p380 = scmp.ne.s32.totalorder %s368, %s369
      %p381 = scmp.eq.s32.totalorder %s41, 1
      %p382 = por %p380, %p381
      %p384 = scmp.ne.s32.totalorder %s369, %s383
      %p385 = scmp.eq.s32.totalorder %s41, 0
      %p386 = por %p384, %p385
      %s388 = sadd.s32 %s387, 1
      %p391 = scmp.eq.s32.totalorder %s35, 1
      %p392 = scmp.ne.s32.totalorder %s387, %s389
      %p393 = scmp.eq.s32.totalorder %s35, 0
      %p394 = por %p392, %p393
      %p395 = scmp.ne.s32.totalorder %s387, %s389
      %p396 = scmp.eq.s32.totalorder %s40, 1
      %p397 = por %p395, %p396
      %p398 = scmp.ne.s32.totalorder %s389, %s390
      %p399 = scmp.eq.s32.totalorder %s40, 0
      %p400 = por %p398, %p399
      %p401 = scmp.ne.s32.totalorder %s389, %s390
      %p402 = scmp.eq.s32.totalorder %s41, 1
      %p403 = por %p401, %p402
      %p405 = scmp.ne.s32.totalorder %s390, %s404
      %p406 = scmp.eq.s32.totalorder %s41, 0
      %p407 = por %p405, %p406
      %s409 = sadd.s32 %s408, 1
      %p412 = scmp.eq.s32.totalorder %s35, 1
      %p413 = scmp.ne.s32.totalorder %s408, %s410
      %p414 = scmp.eq.s32.totalorder %s35, 0
      %p415 = por %p413, %p414
      %p416 = scmp.ne.s32.totalorder %s408, %s410
      %p417 = scmp.eq.s32.totalorder %s40, 1
      %p418 = por %p416, %p417
      %p419 = scmp.ne.s32.totalorder %s410, %s411
      %p420 = scmp.eq.s32.totalorder %s40, 0
      %p421 = por %p419, %p420
      %p422 = scmp.ne.s32.totalorder %s410, %s411
      %p423 = scmp.eq.s32.totalorder %s41, 1
      %p424 = por %p422, %p423
      %p426 = scmp.ne.s32.totalorder %s411, %s425
      %p427 = scmp.eq.s32.totalorder %s41, 0
      %p428 = por %p426, %p427
      %s430 = sadd.s32 %s429, 1
      %p433 = scmp.eq.s32.totalorder %s35, 1
      %p434 = scmp.ne.s32.totalorder %s429, %s431
      %p435 = scmp.eq.s32.totalorder %s35, 0
      %p436 = por %p434, %p435
      %p437 = scmp.ne.s32.totalorder %s429, %s431
      %p438 = scmp.eq.s32.totalorder %s40, 1
      %p439 = por %p437, %p438
      %p440 = scmp.ne.s32.totalorder %s431, %s432
      %p441 = scmp.eq.s32.totalorder %s40, 0
      %p442 = por %p440, %p441
      %p443 = scmp.ne.s32.totalorder %s431, %s432
      %p444 = scmp.eq.s32.totalorder %s41, 1
      %p445 = por %p443, %p444
      %p447 = scmp.ne.s32.totalorder %s432, %s446
      %p448 = scmp.eq.s32.totalorder %s41, 0
      %p449 = por %p447, %p448
      %s451 = sadd.s32 %s450, 1
      %p454 = scmp.eq.s32.totalorder %s35, 1
      %p455 = scmp.ne.s32.totalorder %s450, %s452
      %p456 = scmp.eq.s32.totalorder %s35, 0
      %p457 = por %p455, %p456
      %p458 = scmp.ne.s32.totalorder %s450, %s452
      %p459 = scmp.eq.s32.totalorder %s40, 1
      %p460 = por %p458, %p459
      %p461 = scmp.ne.s32.totalorder %s452, %s453
      %p462 = scmp.eq.s32.totalorder %s40, 0
      %p463 = por %p461, %p462
      %p464 = scmp.ne.s32.totalorder %s452, %s453
      %p465 = scmp.eq.s32.totalorder %s41, 1
      %p466 = por %p464, %p465
      %p468 = scmp.ne.s32.totalorder %s453, %s467
      %p469 = scmp.eq.s32.totalorder %s41, 0
      %p470 = por %p468, %p469
      %s471 = ssub.s32 %s42, %s54
      %s472 = ssub.s32 %s43, %s50
      %s473 = sor.u32 %s471, %s472
      %p474 = scmp.eq.s32.totalorder %s473, 0
      %s476 = sadd.s32 %s475, 1
      %s477 = scalar_select %p474, %s475, %s476
      %p480 = pneg %p474
      %p481 = scmp.eq.s32.totalorder %s35, 1
      %p482 = por %p480, %p481
      %p483 = scmp.ne.s32.totalorder %s475, %s478
      %p484 = scmp.eq.s32.totalorder %s35, 0
      %p485 = por %p483, %p484
      %p486 = scmp.ne.s32.totalorder %s475, %s478
      %p487 = scmp.eq.s32.totalorder %s40, 1
      %p488 = por %p486, %p487
      %p489 = scmp.ne.s32.totalorder %s478, %s479
      %p490 = scmp.eq.s32.totalorder %s40, 0
      %p491 = por %p489, %p490
      %p492 = scmp.ne.s32.totalorder %s478, %s479
      %p493 = scmp.eq.s32.totalorder %s41, 1
      %p494 = por %p492, %p493
      %p496 = scmp.ne.s32.totalorder %s479, %s495
      %p497 = scmp.eq.s32.totalorder %s41, 0
      %p498 = por %p496, %p497
      %p499 = scmp.le.s32.totalorder 1, %s35
      %p500 = scmp.lt.s32.totalorder %s35, 3
      %p501 = pnand %p499, %p500
      %p502 = pneg %p501
      // Predicated region
      $region9: #{tpu_custom_call.1} parent=5 // pred_check
        _
      $region10: #{tpu_custom_call.1} parent=5 // pred_check_branch
        %504 = sbr.rel (%p501) target = $region12
      $region11: #{tpu_custom_call.1} parent=5 // pred_region
        %s505 = ssub.s32 %s35, 1
        // Predicated region
        $region13: #{tpu_custom_call.1} parent=11 // pred_check
          %p506 = pneg %p148
        $region14: #{tpu_custom_call.1} parent=11 // pred_check_branch
          %508 = sbr.rel (%p506) target = $region16
        $region15: #{tpu_custom_call.1} parent=11 // pred_region
          _
        $region16: #{tpu_custom_call.1} parent=11 // pred_fallthru
          _
        // Predicated region
        $region17: #{tpu_custom_call.1} parent=11 // pred_check
          %p509 = pneg %p169
        $region18: #{tpu_custom_call.1} parent=11 // pred_check_branch
          %511 = sbr.rel (%p509) target = $region20
        $region19: #{tpu_custom_call.1} parent=11 // pred_region
          _
        $region20: #{tpu_custom_call.1} parent=11 // pred_fallthru
          _
        // Predicated region
        $region21: #{tpu_custom_call.1} parent=11 // pred_check
          %p512 = pneg %p190
        $region22: #{tpu_custom_call.1} parent=11 // pred_check_branch
          %514 = sbr.rel (%p512) target = $region24
        $region23: #{tpu_custom_call.1} parent=11 // pred_region
          _
        $region24: #{tpu_custom_call.1} parent=11 // pred_fallthru
          _
        // Predicated region
        $region25: #{tpu_custom_call.1} parent=11 // pred_check
          %p515 = pneg %p211
        $region26: #{tpu_custom_call.1} parent=11 // pred_check_branch
          %517 = sbr.rel (%p515) target = $region28
        $region27: #{tpu_custom_call.1} parent=11 // pred_region
          _
        $region28: #{tpu_custom_call.1} parent=11 // pred_fallthru
          _
        // Predicated region
        $region29: #{tpu_custom_call.1} parent=11 // pred_check
          %p518 = pneg %p232
        $region30: #{tpu_custom_call.1} parent=11 // pred_check_branch
          %520 = sbr.rel (%p518) target = $region32
        $region31: #{tpu_custom_call.1} parent=11 // pred_region
          _
        $region32: #{tpu_custom_call.1} parent=11 // pred_fallthru
          _
        // Predicated region
        $region33: #{tpu_custom_call.1} parent=11 // pred_check
          %p521 = pneg %p253
        $region34: #{tpu_custom_call.1} parent=11 // pred_check_branch
          %523 = sbr.rel (%p521) target = $region36
        $region35: #{tpu_custom_call.1} parent=11 // pred_region
          _
        $region36: #{tpu_custom_call.1} parent=11 // pred_fallthru
          _
        // Predicated region
        $region37: #{tpu_custom_call.1} parent=11 // pred_check
          %p524 = pneg %p274
        $region38: #{tpu_custom_call.1} parent=11 // pred_check_branch
          %526 = sbr.rel (%p524) target = $region40
        $region39: #{tpu_custom_call.1} parent=11 // pred_region
          %s528 = ssub.s32 512, 512
          %529 = vsyncadd [#allocation6], %s528
          %s530 = sshll.u32 [#allocation7], 4
          %s531 = int_to_ptr.vmem [resolvable:$true] %s530
          %536 = dma.hbm_to_vmem [thread:$0]  %s9, 512, %s531, [#allocation6], 128, 128, 8
        $region40: #{tpu_custom_call.1} parent=11 // pred_fallthru
          _
        // Predicated region
        $region41: #{tpu_custom_call.1} parent=11 // pred_check
          %p537 = pneg %p295
        $region42: #{tpu_custom_call.1} parent=11 // pred_check_branch
          %539 = sbr.rel (%p537) target = $region44
        $region43: #{tpu_custom_call.1} parent=11 // pred_region
          _
        $region44: #{tpu_custom_call.1} parent=11 // pred_fallthru
          _
        // Predicated region
        $region45: #{tpu_custom_call.1} parent=11 // pred_check
          %p540 = pneg %p316
        $region46: #{tpu_custom_call.1} parent=11 // pred_check_branch
          %542 = sbr.rel (%p540) target = $region48
        $region47: #{tpu_custom_call.1} parent=11 // pred_region
          _
        $region48: #{tpu_custom_call.1} parent=11 // pred_fallthru
          _
        // Predicated region
        $region49: #{tpu_custom_call.1} parent=11 // pred_check
          %p543 = pneg %p337
        $region50: #{tpu_custom_call.1} parent=11 // pred_check_branch
          %545 = sbr.rel (%p543) target = $region52
        $region51: #{tpu_custom_call.1} parent=11 // pred_region
          _
        $region52: #{tpu_custom_call.1} parent=11 // pred_fallthru
          _
        // Predicated region
        $region53: #{tpu_custom_call.1} parent=11 // pred_check
          %p546 = pneg %p358
        $region54: #{tpu_custom_call.1} parent=11 // pred_check_branch
          %548 = sbr.rel (%p546) target = $region56
        $region55: #{tpu_custom_call.1} parent=11 // pred_region
          %s550 = ssub.s32 512, 512
          %551 = vsyncadd [#allocation9], %s550
          %s552 = sshll.u32 [#allocation8], 4
          %s553 = int_to_ptr.vmem [resolvable:$true] %s552
          %558 = dma.hbm_to_vmem [thread:$0]  %s13, 512, %s553, [#allocation9], 128, 128, 8
        $region56: #{tpu_custom_call.1} parent=11 // pred_fallthru
          _
        // Predicated region
        $region57: #{tpu_custom_call.1} parent=11 // pred_check
          %p559 = pneg %p379
        $region58: #{tpu_custom_call.1} parent=11 // pred_check_branch
          %561 = sbr.rel (%p559) target = $region60
        $region59: #{tpu_custom_call.1} parent=11 // pred_region
          _
        $region60: #{tpu_custom_call.1} parent=11 // pred_fallthru
          _
        // Predicated region
        $region61: #{tpu_custom_call.1} parent=11 // pred_check
          %p562 = pneg %p400
        $region62: #{tpu_custom_call.1} parent=11 // pred_check_branch
          %564 = sbr.rel (%p562) target = $region64
        $region63: #{tpu_custom_call.1} parent=11 // pred_region
          _
        $region64: #{tpu_custom_call.1} parent=11 // pred_fallthru
          _
        // Predicated region
        $region65: #{tpu_custom_call.1} parent=11 // pred_check
          %p565 = pneg %p421
        $region66: #{tpu_custom_call.1} parent=11 // pred_check_branch
          %567 = sbr.rel (%p565) target = $region68
        $region67: #{tpu_custom_call.1} parent=11 // pred_region
          _
        $region68: #{tpu_custom_call.1} parent=11 // pred_fallthru
          _
        // Predicated region
        $region69: #{tpu_custom_call.1} parent=11 // pred_check
          %p568 = pneg %p442
        $region70: #{tpu_custom_call.1} parent=11 // pred_check_branch
          %570 = sbr.rel (%p568) target = $region72
        $region71: #{tpu_custom_call.1} parent=11 // pred_region
          _
        $region72: #{tpu_custom_call.1} parent=11 // pred_fallthru
          _
        // Predicated region
        $region73: #{tpu_custom_call.1} parent=11 // pred_check
          %p571 = pneg %p463
        $region74: #{tpu_custom_call.1} parent=11 // pred_check_branch
          %573 = sbr.rel (%p571) target = $region76
        $region75: #{tpu_custom_call.1} parent=11 // pred_region
          _
        $region76: #{tpu_custom_call.1} parent=11 // pred_fallthru
          _
      $region12: #{tpu_custom_call.1} parent=5 // pred_fallthru
        _
      %p574 = scmp.lt.s32.totalorder %s35, 2
      // Predicated region
      $region77: #{tpu_custom_call.1} parent=5 // pred_check
        %p575 = pneg %p574
      $region78: #{tpu_custom_call.1} parent=5 // pred_check_branch
        %577 = sbr.rel (%p575) target = $region80
      $region79: #{tpu_custom_call.1} parent=5 // pred_region
        // Predicated region
        $region81: #{tpu_custom_call.1} parent=79 // pred_check
          %p578 = pneg %p69
        $region82: #{tpu_custom_call.1} parent=79 // pred_check_branch
          %580 = sbr.rel (%p578) target = $region84
        $region83: #{tpu_custom_call.1} parent=79 // pred_region
          %s581 = sand.u32 %s59, 1
          %s582 = scalar_lea.sflag [#allocation3], %s581
          %s583 = sand.u32 %s59, 1
          %s584 = smul.addr %s583, 8
          %s585 = scalar_lea.vmem [#allocation2], %s584
          %s587 = ssub.s32 128, 128
          %588 = vsyncadd %s582, %s587
          %s589 = sadd.s32 %s43, %s42
          %s590 = smul.addr %s589, 128
          %s591 = scalar_lea.hbm %s0, %s590
          %s593 = sshll.u32 %s585, 4
          %s594 = int_to_ptr.vmem [resolvable:$true] %s593
          %596 = dma.hbm_to_vmem [thread:$0]  %s591, 128, %s594, %s582
        $region84: #{tpu_custom_call.1} parent=79 // pred_fallthru
          _
        // Predicated region
        $region85: #{tpu_custom_call.1} parent=79 // pred_check
          %p597 = pneg %p95
        $region86: #{tpu_custom_call.1} parent=79 // pred_check_branch
          %599 = sbr.rel (%p597) target = $region88
        $region87: #{tpu_custom_call.1} parent=79 // pred_region
          %s600 = sand.u32 %s35, 1
          %s601 = scalar_lea.sflag [#allocation6], %s600
          %s602 = sand.u32 %s85, 1
          %s603 = smul.addr %s602, 8
          %s604 = scalar_lea.vmem [#allocation5], %s603
          %s606 = ssub.s32 128, 128
          %607 = vsyncadd %s601, %s606
          %s608 = smul.addr %s42, 128
          %s609 = scalar_lea.hbm %s1, %s608
          %s611 = sshll.u32 %s604, 4
          %s612 = int_to_ptr.vmem [resolvable:$true] %s611
          %614 = dma.hbm_to_vmem [thread:$0]  %s609, 128, %s612, %s601
        $region88: #{tpu_custom_call.1} parent=79 // pred_fallthru
          _
        // Predicated region
        $region89: #{tpu_custom_call.1} parent=79 // pred_check
          %p615 = pneg %p121
        $region90: #{tpu_custom_call.1} parent=79 // pred_check_branch
          %617 = sbr.rel (%p615) target = $region92
        $region91: #{tpu_custom_call.1} parent=79 // pred_region
          %p618 = scmp.lt.s32.totalorder %s42, 1
          %s619 = scalar_select %p618, %s42, 1
          %s620 = scalar_lea.vmem %s2, %s619
        $region92: #{tpu_custom_call.1} parent=79 // pred_fallthru
          _
      $region80: #{tpu_custom_call.1} parent=5 // pred_fallthru
        _
      %p621 = scmp.le.s32.totalorder 1, %s35
      %p622 = scmp.lt.s32.totalorder %s35, 3
      %p623 = pnand %p621, %p622
      %p624 = pneg %p623
      // Predicated region
      $region93: #{tpu_custom_call.1} parent=5 // pred_check
        _
      $region94: #{tpu_custom_call.1} parent=5 // pred_check_branch
        %626 = sbr.rel (%p623) target = $region96
      $region95: #{tpu_custom_call.1} parent=5 // pred_region
        %s627 = ssub.s32 %s35, 1
        %s628 = sand.u32 %s62, 1
        %s629 = scalar_lea.sflag [#allocation3], %s628
        %s630 = sand.u32 %s62, 1
        %s631 = smul.addr %s630, 8
        %s632 = scalar_lea.vmem [#allocation2], %s631
        // Predicated region
        $region97: #{tpu_custom_call.1} parent=95 // pred_check
          %p633 = pneg %p75
        $region98: #{tpu_custom_call.1} parent=95 // pred_check_branch
          %635 = sbr.rel (%p633) target = $region100
        $region99: #{tpu_custom_call.1} parent=95 // pred_region
          %636 = dma.done %s629, 128
        $region100: #{tpu_custom_call.1} parent=95 // pred_fallthru
          _
        %s637 = sand.u32 %s40, 1
        %s638 = scalar_lea.sflag [#allocation6], %s637
        %s639 = sand.u32 %s88, 1
        %s640 = smul.addr %s639, 8
        %s641 = scalar_lea.vmem [#allocation5], %s640
        // Predicated region
        $region101: #{tpu_custom_call.1} parent=95 // pred_check
          %p642 = pneg %p101
        $region102: #{tpu_custom_call.1} parent=95 // pred_check_branch
          %644 = sbr.rel (%p642) target = $region104
        $region103: #{tpu_custom_call.1} parent=95 // pred_region
          %645 = dma.done %s638, 128
        $region104: #{tpu_custom_call.1} parent=95 // pred_fallthru
          _
        // Predicated region
        $region105: #{tpu_custom_call.1} parent=95 // pred_check
          %p646 = pneg %p274
        $region106: #{tpu_custom_call.1} parent=95 // pred_check_branch
          %648 = sbr.rel (%p646) target = $region108
        $region107: #{tpu_custom_call.1} parent=95 // pred_region
          %649 = dma.done [#allocation6], 512
        $region108: #{tpu_custom_call.1} parent=95 // pred_fallthru
          _
        // Predicated region
        $region109: #{tpu_custom_call.1} parent=95 // pred_check
          %p650 = pneg %p358
        $region110: #{tpu_custom_call.1} parent=95 // pred_check_branch
          %652 = sbr.rel (%p650) target = $region112
        $region111: #{tpu_custom_call.1} parent=95 // pred_region
          %653 = dma.done [#allocation9], 512
        $region112: #{tpu_custom_call.1} parent=95 // pred_fallthru
          _
        %s654 = sand.u32 %s62, 1
        %s655 = scalar_lea.sflag [#allocation3], %s654
        %s656 = sand.u32 %s62, 1
        %s657 = smul.addr %s656, 8
        %s658 = scalar_lea.vmem [#allocation2], %s657
        %p659 = pneg %p75
        %p660 = pneg %p72
        %s661 = sand.u32 %s40, 1
        %s662 = scalar_lea.sflag [#allocation6], %s661
        %s663 = sand.u32 %s88, 1
        %s664 = smul.addr %s663, 8
        %s665 = scalar_lea.vmem [#allocation5], %s664
        %p666 = pneg %p101
        %p667 = pneg %p98
        %p668 = scmp.lt.s32.totalorder %s44, 1
        %s669 = scalar_select %p668, %s44, 1
        %s670 = scalar_lea.vmem %s2, %s669
        %p671 = pneg %p127
        %p672 = pneg %p124
        %p673 = pneg %p148
        %p674 = pneg %p145
        %p675 = pneg %p169
        %p676 = pneg %p166
        %p677 = pneg %p190
        %p678 = pneg %p187
        %p679 = pneg %p211
        %p680 = pneg %p208
        %p681 = pneg %p232
        %p682 = pneg %p229
        %p683 = pneg %p253
        %p684 = pneg %p250
        %p685 = pneg %p274
        %p686 = pneg %p271
        %p687 = pneg %p295
        %p688 = pneg %p292
        %p689 = pneg %p316
        %p690 = pneg %p313
        %p691 = pneg %p337
        %p692 = pneg %p334
        %p693 = pneg %p358
        %p694 = pneg %p355
        %p695 = pneg %p379
        %p696 = pneg %p376
        %p697 = pneg %p400
        %p698 = pneg %p397
        %p699 = pneg %p421
        %p700 = pneg %p418
        %p701 = pneg %p442
        %p702 = pneg %p439
        %p703 = pneg %p463
        %p704 = pneg %p460
        %p705 = pneg %p491
        %p706 = pneg %p488
        %s707 = sand.u32 %s478, 1
        %s708 = scalar_lea.sflag [#allocation4], %s707
        %s709 = sand.u32 %s478, 1
        %s710 = smul.addr %s709, 8
        %s711 = scalar_lea.vmem [#allocation10], %s710
        %p712 = scmp.lt.s32.totalorder %s44, 1
        %s713 = scalar_select %p712, %s44, 1
        %s714 = scalar_lea.vmem %s2, %s713
        %v715 = vld [vmem:[%s632] sm:$0xff]
        %v716 = vld [vmem:[%s641] sm:$0xff]
        %v717 = vld [vmem:[%s3] sm:$0xff]
        %v718 = vld [vmem:[%s3 + $0x8] sm:$0xff]
        %v719 = vld [vmem:[%s3 + $0x10] sm:$0xff]
        %v720 = vld [vmem:[%s3 + $0x18] sm:$0xff]
        %v721 = vld [vmem:[%s4] sm:$0x1]
        %v723 = vlaneseq
        %v724 = vshrl.u32 %v723, 7
        %v725 = vsub.s32 0, %v724
        %v726 = vrot.slane %v721, %v725
        %vm728 = vcmask 261120
        %v730 = vsel %vm728, %v715, 0
        %732 = vmatprep.subr.mxu0 0.0
        %733 = vmatpush1.msra.mxu0 %v717
        %734 = vmatprep.subr.mxu0 0.0
        %735 = vmatpush1.msra.mxu0 %v718
        %736 = vmatprep.subr.mxu0 0.0
        %737 = vmatpush1.msra.mxu0 %v719
        %738 = vmatprep.subr.mxu0 0.0
        %739 = vmatpush1.msra.mxu0 %v720
        %740 = vmatprep.subr.mxu0 0.0
        %741 = vmatpush1.msra.mxu0 0.0
        %742 = vmatprep.subr.mxu0 0.0
        %743 = vmatpush1.msra.mxu0 0.0
        %744 = vmatprep.subr.mxu0 0.0
        %745 = vmatpush1.msra.mxu0 0.0
        %746 = vmatprep.subr.mxu0 0.0
        %747 = vmatpush1.msra.mxu0 0.0
        %748 = vmatprep.subr.mxu0 0.0
        %749 = vmatpush1.msra.mxu0 0.0
        %750 = vmatprep.subr.mxu0 0.0
        %751 = vmatpush1.msra.mxu0 0.0
        %752 = vmatprep.subr.mxu0 0.0
        %753 = vmatpush1.msra.mxu0 0.0
        %754 = vmatprep.subr.mxu0 0.0
        %755 = vmatpush1.msra.mxu0 0.0
        %756 = vmatprep.subr.mxu0 0.0
        %757 = vmatpush1.msra.mxu0 0.0
        %758 = vmatprep.subr.mxu0 0.0
        %759 = vmatpush1.msra.mxu0 0.0
        %760 = vmatprep.subr.mxu0 0.0
        %761 = vmatpush1.msra.mxu0 0.0
        %762 = vmatprep.subr.mxu0 0.0
        %763 = vmatpush1.msra.mxu0 0.0
        %764 = vmatprep.subr.mxu0 0.0
        %765 = vmatpush1.msra.mxu0 0.0
        %766 = vmatprep.subr.mxu0 0.0
        %767 = vmatpush1.msra.mxu0 0.0
        %768 = vmatprep.subr.mxu0 0.0
        %769 = vmatpush1.msra.mxu0 0.0
        %770 = vmatprep.subr.mxu0 0.0
        %771 = vmatpush1.msra.mxu0 0.0
        %772 = vmatprep.subr.mxu0 0.0
        %773 = vmatpush1.msra.mxu0 0.0
        %774 = vmatprep.subr.mxu0 0.0
        %775 = vmatpush1.msra.mxu0 0.0
        %776 = vmatprep.subr.mxu0 0.0
        %777 = vmatpush1.msra.mxu0 0.0
        %778 = vmatprep.subr.mxu0 0.0
        %779 = vmatpush1.msra.mxu0 0.0
        %780 = vmatprep.subr.mxu0 0.0
        %781 = vmatpush1.msra.mxu0 0.0
        %782 = vmatprep.subr.mxu0 0.0
        %783 = vmatpush1.msra.mxu0 0.0
        %784 = vmatprep.subr.mxu0 0.0
        %785 = vmatpush1.msra.mxu0 0.0
        %786 = vmatprep.subr.mxu0 0.0
        %787 = vmatpush1.msra.mxu0 0.0
        %788 = vmatprep.subr.mxu0 0.0
        %789 = vmatpush1.msra.mxu0 0.0
        %790 = vmatprep.subr.mxu0 0.0
        %791 = vmatpush1.msra.mxu0 0.0
        %792 = vmatprep.subr.mxu0 0.0
        %793 = vmatpush1.msra.mxu0 0.0
        %794 = vmatprep.subr.mxu0 0.0
        %795 = vmatpush1.msra.mxu0 0.0
        %796 = vmatprep.mubr.f32.mxu0 0.0
        %797 = vmatmul.mubr.f32.gmra.mrb[0].mxu0 %v730
        %v798 = vpop.f32.mrb[0].mxu0
        %v799 = vadd.f32 %v726, %v798
        %v800 = vpop.f32.mrb[0].mxu0
        %801 = vdwg.mxu0
        %v802 = vld [vmem:[%s5] sm:$0xff]
        %v803 = vld [vmem:[%s5 + $0x8] sm:$0xff]
        %v804 = vld [vmem:[%s5 + $0x10] sm:$0xff]
        %v805 = vld [vmem:[%s5 + $0x18] sm:$0xff]
        %v806 = vld [vmem:[%s6] sm:$0x1]
        %v808 = vlaneseq
        %v809 = vshrl.u32 %v808, 7
        %v810 = vsub.s32 0, %v809
        %v811 = vrot.slane %v806, %v810
        %v814 = vsel %vm728, %v716, 0
        %816 = vmatprep.subr.mxu0 0.0
        %817 = vmatpush1.msra.mxu0 %v802
        %818 = vmatprep.subr.mxu0 0.0
        %819 = vmatpush1.msra.mxu0 %v803
        %820 = vmatprep.subr.mxu0 0.0
        %821 = vmatpush1.msra.mxu0 %v804
        %822 = vmatprep.subr.mxu0 0.0
        %823 = vmatpush1.msra.mxu0 %v805
        %824 = vmatprep.subr.mxu0 0.0
        %825 = vmatpush1.msra.mxu0 0.0
        %826 = vmatprep.subr.mxu0 0.0
        %827 = vmatpush1.msra.mxu0 0.0
        %828 = vmatprep.subr.mxu0 0.0
        %829 = vmatpush1.msra.mxu0 0.0
        %830 = vmatprep.subr.mxu0 0.0
        %831 = vmatpush1.msra.mxu0 0.0
        %832 = vmatprep.subr.mxu0 0.0
        %833 = vmatpush1.msra.mxu0 0.0
        %834 = vmatprep.subr.mxu0 0.0
        %835 = vmatpush1.msra.mxu0 0.0
        %836 = vmatprep.subr.mxu0 0.0
        %837 = vmatpush1.msra.mxu0 0.0
        %838 = vmatprep.subr.mxu0 0.0
        %839 = vmatpush1.msra.mxu0 0.0
        %840 = vmatprep.subr.mxu0 0.0
        %841 = vmatpush1.msra.mxu0 0.0
        %842 = vmatprep.subr.mxu0 0.0
        %843 = vmatpush1.msra.mxu0 0.0
        %844 = vmatprep.subr.mxu0 0.0
        %845 = vmatpush1.msra.mxu0 0.0
        %846 = vmatprep.subr.mxu0 0.0
        %847 = vmatpush1.msra.mxu0 0.0
        %848 = vmatprep.subr.mxu0 0.0
        %849 = vmatpush1.msra.mxu0 0.0
        %850 = vmatprep.subr.mxu0 0.0
        %851 = vmatpush1.msra.mxu0 0.0
        %852 = vmatprep.subr.mxu0 0.0
        %853 = vmatpush1.msra.mxu0 0.0
        %854 = vmatprep.subr.mxu0 0.0
        %855 = vmatpush1.msra.mxu0 0.0
        %856 = vmatprep.subr.mxu0 0.0
        %857 = vmatpush1.msra.mxu0 0.0
        %858 = vmatprep.subr.mxu0 0.0
        %859 = vmatpush1.msra.mxu0 0.0
        %860 = vmatprep.subr.mxu0 0.0
        %861 = vmatpush1.msra.mxu0 0.0
        %862 = vmatprep.subr.mxu0 0.0
        %863 = vmatpush1.msra.mxu0 0.0
        %864 = vmatprep.subr.mxu0 0.0
        %865 = vmatpush1.msra.mxu0 0.0
        %866 = vmatprep.subr.mxu0 0.0
        %867 = vmatpush1.msra.mxu0 0.0
        %868 = vmatprep.subr.mxu0 0.0
        %869 = vmatpush1.msra.mxu0 0.0
        %870 = vmatprep.subr.mxu0 0.0
        %871 = vmatpush1.msra.mxu0 0.0
        %872 = vmatprep.subr.mxu0 0.0
        %873 = vmatpush1.msra.mxu0 0.0
        %874 = vmatprep.subr.mxu0 0.0
        %875 = vmatpush1.msra.mxu0 0.0
        %876 = vmatprep.subr.mxu0 0.0
        %877 = vmatpush1.msra.mxu0 0.0
        %878 = vmatprep.subr.mxu0 0.0
        %879 = vmatpush1.msra.mxu0 0.0
        %880 = vmatprep.mubr.f32.mxu0 0.0
        %881 = vmatmul.mubr.f32.gmra.mrb[0].mxu0 %v814
        %v882 = vpop.f32.mrb[0].mxu0
        %v883 = vadd.f32 %v811, %v882
        %v884 = vpop.f32.mrb[0].mxu0
        %885 = vdwg.mxu0
        %v886 = vld [vmem:[%s7] sm:$0xff]
        %v887 = vld [vmem:[%s7 + $0x8] sm:$0xff]
        %v888 = vld [vmem:[%s7 + $0x10] sm:$0xff]
        %v889 = vld [vmem:[%s7 + $0x18] sm:$0xff]
        %v890 = vld [vmem:[%s8] sm:$0x1]
        %v892 = vlaneseq
        %v893 = vshrl.u32 %v892, 7
        %v894 = vsub.s32 0, %v893
        %v895 = vrot.slane %v890, %v894
        %897 = vmatprep.subr.mxu0 0.0
        %898 = vmatpush1.msra.mxu0 %v886
        %899 = vmatprep.subr.mxu0 0.0
        %900 = vmatpush1.msra.mxu0 %v887
        %901 = vmatprep.subr.mxu0 0.0
        %902 = vmatpush1.msra.mxu0 %v888
        %903 = vmatprep.subr.mxu0 0.0
        %904 = vmatpush1.msra.mxu0 %v889
        %905 = vmatprep.subr.mxu0 0.0
        %906 = vmatpush1.msra.mxu0 0.0
        %907 = vmatprep.subr.mxu0 0.0
        %908 = vmatpush1.msra.mxu0 0.0
        %909 = vmatprep.subr.mxu0 0.0
        %910 = vmatpush1.msra.mxu0 0.0
        %911 = vmatprep.subr.mxu0 0.0
        %912 = vmatpush1.msra.mxu0 0.0
        %913 = vmatprep.subr.mxu0 0.0
        %914 = vmatpush1.msra.mxu0 0.0
        %915 = vmatprep.subr.mxu0 0.0
        %916 = vmatpush1.msra.mxu0 0.0
        %917 = vmatprep.subr.mxu0 0.0
        %918 = vmatpush1.msra.mxu0 0.0
        %919 = vmatprep.subr.mxu0 0.0
        %920 = vmatpush1.msra.mxu0 0.0
        %921 = vmatprep.subr.mxu0 0.0
        %922 = vmatpush1.msra.mxu0 0.0
        %923 = vmatprep.subr.mxu0 0.0
        %924 = vmatpush1.msra.mxu0 0.0
        %925 = vmatprep.subr.mxu0 0.0
        %926 = vmatpush1.msra.mxu0 0.0
        %927 = vmatprep.subr.mxu0 0.0
        %928 = vmatpush1.msra.mxu0 0.0
        %929 = vmatprep.subr.mxu0 0.0
        %930 = vmatpush1.msra.mxu0 0.0
        %931 = vmatprep.subr.mxu0 0.0
        %932 = vmatpush1.msra.mxu0 0.0
        %933 = vmatprep.subr.mxu0 0.0
        %934 = vmatpush1.msra.mxu0 0.0
        %935 = vmatprep.subr.mxu0 0.0
        %936 = vmatpush1.msra.mxu0 0.0
        %937 = vmatprep.subr.mxu0 0.0
        %938 = vmatpush1.msra.mxu0 0.0
        %939 = vmatprep.subr.mxu0 0.0
        %940 = vmatpush1.msra.mxu0 0.0
        %941 = vmatprep.subr.mxu0 0.0
        %942 = vmatpush1.msra.mxu0 0.0
        %943 = vmatprep.subr.mxu0 0.0
        %944 = vmatpush1.msra.mxu0 0.0
        %945 = vmatprep.subr.mxu0 0.0
        %946 = vmatpush1.msra.mxu0 0.0
        %947 = vmatprep.subr.mxu0 0.0
        %948 = vmatpush1.msra.mxu0 0.0
        %949 = vmatprep.subr.mxu0 0.0
        %950 = vmatpush1.msra.mxu0 0.0
        %951 = vmatprep.subr.mxu0 0.0
        %952 = vmatpush1.msra.mxu0 0.0
        %953 = vmatprep.subr.mxu0 0.0
        %954 = vmatpush1.msra.mxu0 0.0
        %955 = vmatprep.subr.mxu0 0.0
        %956 = vmatpush1.msra.mxu0 0.0
        %957 = vmatprep.subr.mxu0 0.0
        %958 = vmatpush1.msra.mxu0 0.0
        %959 = vmatprep.subr.mxu0 0.0
        %960 = vmatpush1.msra.mxu0 0.0
        %961 = vmatprep.mubr.f32.mxu0 0.0
        %962 = vmatmul.mubr.f32.gmra.mrb[0].mxu0 %v814
        %v963 = vpop.f32.mrb[0].mxu0
        %v964 = vadd.f32 %v895, %v963
        %v965 = vpop.f32.mrb[0].mxu0
        %966 = vdwg.mxu0
        %968 = vrot.lane.b32.xlu0 %v799, 120
        %v969 = vpop.permute.xlu0 %968
        %970 = vrot.lane.b32.xlu0 %v799, 112
        %v971 = vpop.permute.xlu0 %970
        %972 = vrot.lane.b32.xlu0 %v799, 104
        %v973 = vpop.permute.xlu0 %972
        %975 = vrot.lane.b32.xlu0 %v883, 120
        %v976 = vpop.permute.xlu0 %975
        %977 = vrot.lane.b32.xlu0 %v883, 112
        %v978 = vpop.permute.xlu0 %977
        %979 = vrot.lane.b32.xlu0 %v883, 104
        %v980 = vpop.permute.xlu0 %979
        %982 = vrot.lane.b32.xlu0 %v964, 120
        %v983 = vpop.permute.xlu0 %982
        %985 = vrot.lane.b32.xlu0 %v964, 112
        %v986 = vpop.permute.xlu0 %985
        %988 = vrot.lane.b32.xlu0 %v964, 104
        %v989 = vpop.permute.xlu0 %988
        %vm991 = vcmask 64512
        %v992 = vsel %vm991, %v799, 0
        %v994 = vsel %vm991, %v883, 0
        %996 = vmatprep.subr.mxu0 0.0
        %997 = vmatpush1.xpose.msra.mxu0 %v994
        %998 = vmatprep.subr.mxu0 0.0
        %999 = vmatpush1.xpose.msra.mxu0 0.0
        %1000 = vmatprep.subr.mxu0 0.0
        %1001 = vmatpush1.xpose.msra.mxu0 0.0
        %1002 = vmatprep.subr.mxu0 0.0
        %1003 = vmatpush1.xpose.msra.mxu0 0.0
        %1004 = vmatprep.subr.mxu0 0.0
        %1005 = vmatpush1.xpose.msra.mxu0 0.0
        %1006 = vmatprep.subr.mxu0 0.0
        %1007 = vmatpush1.xpose.msra.mxu0 0.0
        %1008 = vmatprep.subr.mxu0 0.0
        %1009 = vmatpush1.xpose.msra.mxu0 0.0
        %1010 = vmatprep.subr.mxu0 0.0
        %1011 = vmatpush1.xpose.msra.mxu0 0.0
        %1012 = vmatprep.subr.mxu0 0.0
        %1013 = vmatpush1.xpose.msra.mxu0 0.0
        %1014 = vmatprep.subr.mxu0 0.0
        %1015 = vmatpush1.xpose.msra.mxu0 0.0
        %1016 = vmatprep.subr.mxu0 0.0
        %1017 = vmatpush1.xpose.msra.mxu0 0.0
        %1018 = vmatprep.subr.mxu0 0.0
        %1019 = vmatpush1.xpose.msra.mxu0 0.0
        %1020 = vmatprep.subr.mxu0 0.0
        %1021 = vmatpush1.xpose.msra.mxu0 0.0
        %1022 = vmatprep.subr.mxu0 0.0
        %1023 = vmatpush1.xpose.msra.mxu0 0.0
        %1024 = vmatprep.subr.mxu0 0.0
        %1025 = vmatpush1.xpose.msra.mxu0 0.0
        %1026 = vmatprep.subr.mxu0 0.0
        %1027 = vmatpush1.xpose.msra.mxu0 0.0
        %1028 = vmatprep.subr.mxu0 0.0
        %1029 = vmatpush1.xpose.msra.mxu0 0.0
        %1030 = vmatprep.subr.mxu0 0.0
        %1031 = vmatpush1.xpose.msra.mxu0 0.0
        %1032 = vmatprep.subr.mxu0 0.0
        %1033 = vmatpush1.xpose.msra.mxu0 0.0
        %1034 = vmatprep.subr.mxu0 0.0
        %1035 = vmatpush1.xpose.msra.mxu0 0.0
        %1036 = vmatprep.subr.mxu0 0.0
        %1037 = vmatpush1.xpose.msra.mxu0 0.0
        %1038 = vmatprep.subr.mxu0 0.0
        %1039 = vmatpush1.xpose.msra.mxu0 0.0
        %1040 = vmatprep.subr.mxu0 0.0
        %1041 = vmatpush1.xpose.msra.mxu0 0.0
        %1042 = vmatprep.subr.mxu0 0.0
        %1043 = vmatpush1.xpose.msra.mxu0 0.0
        %1044 = vmatprep.subr.mxu0 0.0
        %1045 = vmatpush1.xpose.msra.mxu0 0.0
        %1046 = vmatprep.subr.mxu0 0.0
        %1047 = vmatpush1.xpose.msra.mxu0 0.0
        %1048 = vmatprep.subr.mxu0 0.0
        %1049 = vmatpush1.xpose.msra.mxu0 0.0
        %1050 = vmatprep.subr.mxu0 0.0
        %1051 = vmatpush1.xpose.msra.mxu0 0.0
        %1052 = vmatprep.subr.mxu0 0.0
        %1053 = vmatpush1.xpose.msra.mxu0 0.0
        %1054 = vmatprep.subr.mxu0 0.0
        %1055 = vmatpush1.xpose.msra.mxu0 0.0
        %1056 = vmatprep.subr.mxu0 0.0
        %1057 = vmatpush1.xpose.msra.mxu0 0.0
        %1058 = vmatprep.subr.mxu0 0.0
        %1059 = vmatpush1.xpose.msra.mxu0 0.0
        %1060 = vmatprep.mubr.f32.mxu0 0.0
        %1061 = vmatmul.mubr.f32.gmra.mrb[0].mxu0 %v992
        %v1062 = vpop.f32.mrb[0].mxu0
        %v1063 = vadd.f32 0.0, %v1062
        %v1064 = vpop.f32.mrb[0].mxu0
        %1065 = vdwg.mxu0
        %v1066 = vsel %vm991, %v969, 0
        %v1068 = vsel %vm991, %v976, 0
        %1070 = vmatprep.subr.mxu0 0.0
        %1071 = vmatpush1.xpose.msra.mxu0 %v1068
        %1072 = vmatprep.subr.mxu0 0.0
        %1073 = vmatpush1.xpose.msra.mxu0 0.0
        %1074 = vmatprep.subr.mxu0 0.0
        %1075 = vmatpush1.xpose.msra.mxu0 0.0
        %1076 = vmatprep.subr.mxu0 0.0
        %1077 = vmatpush1.xpose.msra.mxu0 0.0
        %1078 = vmatprep.subr.mxu0 0.0
        %1079 = vmatpush1.xpose.msra.mxu0 0.0
        %1080 = vmatprep.subr.mxu0 0.0
        %1081 = vmatpush1.xpose.msra.mxu0 0.0
        %1082 = vmatprep.subr.mxu0 0.0
        %1083 = vmatpush1.xpose.msra.mxu0 0.0
        %1084 = vmatprep.subr.mxu0 0.0
        %1085 = vmatpush1.xpose.msra.mxu0 0.0
        %1086 = vmatprep.subr.mxu0 0.0
        %1087 = vmatpush1.xpose.msra.mxu0 0.0
        %1088 = vmatprep.subr.mxu0 0.0
        %1089 = vmatpush1.xpose.msra.mxu0 0.0
        %1090 = vmatprep.subr.mxu0 0.0
        %1091 = vmatpush1.xpose.msra.mxu0 0.0
        %1092 = vmatprep.subr.mxu0 0.0
        %1093 = vmatpush1.xpose.msra.mxu0 0.0
        %1094 = vmatprep.subr.mxu0 0.0
        %1095 = vmatpush1.xpose.msra.mxu0 0.0
        %1096 = vmatprep.subr.mxu0 0.0
        %1097 = vmatpush1.xpose.msra.mxu0 0.0
        %1098 = vmatprep.subr.mxu0 0.0
        %1099 = vmatpush1.xpose.msra.mxu0 0.0
        %1100 = vmatprep.subr.mxu0 0.0
        %1101 = vmatpush1.xpose.msra.mxu0 0.0
        %1102 = vmatprep.subr.mxu0 0.0
        %1103 = vmatpush1.xpose.msra.mxu0 0.0
        %1104 = vmatprep.subr.mxu0 0.0
        %1105 = vmatpush1.xpose.msra.mxu0 0.0
        %1106 = vmatprep.subr.mxu0 0.0
        %1107 = vmatpush1.xpose.msra.mxu0 0.0
        %1108 = vmatprep.subr.mxu0 0.0
        %1109 = vmatpush1.xpose.msra.mxu0 0.0
        %1110 = vmatprep.subr.mxu0 0.0
        %1111 = vmatpush1.xpose.msra.mxu0 0.0
        %1112 = vmatprep.subr.mxu0 0.0
        %1113 = vmatpush1.xpose.msra.mxu0 0.0
        %1114 = vmatprep.subr.mxu0 0.0
        %1115 = vmatpush1.xpose.msra.mxu0 0.0
        %1116 = vmatprep.subr.mxu0 0.0
        %1117 = vmatpush1.xpose.msra.mxu0 0.0
        %1118 = vmatprep.subr.mxu0 0.0
        %1119 = vmatpush1.xpose.msra.mxu0 0.0
        %1120 = vmatprep.subr.mxu0 0.0
        %1121 = vmatpush1.xpose.msra.mxu0 0.0
        %1122 = vmatprep.subr.mxu0 0.0
        %1123 = vmatpush1.xpose.msra.mxu0 0.0
        %1124 = vmatprep.subr.mxu0 0.0
        %1125 = vmatpush1.xpose.msra.mxu0 0.0
        %1126 = vmatprep.subr.mxu0 0.0
        %1127 = vmatpush1.xpose.msra.mxu0 0.0
        %1128 = vmatprep.subr.mxu0 0.0
        %1129 = vmatpush1.xpose.msra.mxu0 0.0
        %1130 = vmatprep.subr.mxu0 0.0
        %1131 = vmatpush1.xpose.msra.mxu0 0.0
        %1132 = vmatprep.subr.mxu0 0.0
        %1133 = vmatpush1.xpose.msra.mxu0 0.0
        %1134 = vmatprep.mubr.f32.mxu0 0.0
        %1135 = vmatmul.mubr.f32.gmra.mrb[0].mxu0 %v1066
        %v1136 = vpop.f32.mrb[0].mxu0
        %v1137 = vadd.f32 0.0, %v1136
        %v1138 = vpop.f32.mrb[0].mxu0
        %1139 = vdwg.mxu0
        %v1140 = vsel %vm991, %v971, 0
        %v1142 = vsel %vm991, %v978, 0
        %1144 = vmatprep.subr.mxu0 0.0
        %1145 = vmatpush1.xpose.msra.mxu0 %v1142
        %1146 = vmatprep.subr.mxu0 0.0
        %1147 = vmatpush1.xpose.msra.mxu0 0.0
        %1148 = vmatprep.subr.mxu0 0.0
        %1149 = vmatpush1.xpose.msra.mxu0 0.0
        %1150 = vmatprep.subr.mxu0 0.0
        %1151 = vmatpush1.xpose.msra.mxu0 0.0
        %1152 = vmatprep.subr.mxu0 0.0
        %1153 = vmatpush1.xpose.msra.mxu0 0.0
        %1154 = vmatprep.subr.mxu0 0.0
        %1155 = vmatpush1.xpose.msra.mxu0 0.0
        %1156 = vmatprep.subr.mxu0 0.0
        %1157 = vmatpush1.xpose.msra.mxu0 0.0
        %1158 = vmatprep.subr.mxu0 0.0
        %1159 = vmatpush1.xpose.msra.mxu0 0.0
        %1160 = vmatprep.subr.mxu0 0.0
        %1161 = vmatpush1.xpose.msra.mxu0 0.0
        %1162 = vmatprep.subr.mxu0 0.0
        %1163 = vmatpush1.xpose.msra.mxu0 0.0
        %1164 = vmatprep.subr.mxu0 0.0
        %1165 = vmatpush1.xpose.msra.mxu0 0.0
        %1166 = vmatprep.subr.mxu0 0.0
        %1167 = vmatpush1.xpose.msra.mxu0 0.0
        %1168 = vmatprep.subr.mxu0 0.0
        %1169 = vmatpush1.xpose.msra.mxu0 0.0
        %1170 = vmatprep.subr.mxu0 0.0
        %1171 = vmatpush1.xpose.msra.mxu0 0.0
        %1172 = vmatprep.subr.mxu0 0.0
        %1173 = vmatpush1.xpose.msra.mxu0 0.0
        %1174 = vmatprep.subr.mxu0 0.0
        %1175 = vmatpush1.xpose.msra.mxu0 0.0
        %1176 = vmatprep.subr.mxu0 0.0
        %1177 = vmatpush1.xpose.msra.mxu0 0.0
        %1178 = vmatprep.subr.mxu0 0.0
        %1179 = vmatpush1.xpose.msra.mxu0 0.0
        %1180 = vmatprep.subr.mxu0 0.0
        %1181 = vmatpush1.xpose.msra.mxu0 0.0
        %1182 = vmatprep.subr.mxu0 0.0
        %1183 = vmatpush1.xpose.msra.mxu0 0.0
        %1184 = vmatprep.subr.mxu0 0.0
        %1185 = vmatpush1.xpose.msra.mxu0 0.0
        %1186 = vmatprep.subr.mxu0 0.0
        %1187 = vmatpush1.xpose.msra.mxu0 0.0
        %1188 = vmatprep.subr.mxu0 0.0
        %1189 = vmatpush1.xpose.msra.mxu0 0.0
        %1190 = vmatprep.subr.mxu0 0.0
        %1191 = vmatpush1.xpose.msra.mxu0 0.0
        %1192 = vmatprep.subr.mxu0 0.0
        %1193 = vmatpush1.xpose.msra.mxu0 0.0
        %1194 = vmatprep.subr.mxu0 0.0
        %1195 = vmatpush1.xpose.msra.mxu0 0.0
        %1196 = vmatprep.subr.mxu0 0.0
        %1197 = vmatpush1.xpose.msra.mxu0 0.0
        %1198 = vmatprep.subr.mxu0 0.0
        %1199 = vmatpush1.xpose.msra.mxu0 0.0
        %1200 = vmatprep.subr.mxu0 0.0
        %1201 = vmatpush1.xpose.msra.mxu0 0.0
        %1202 = vmatprep.subr.mxu0 0.0
        %1203 = vmatpush1.xpose.msra.mxu0 0.0
        %1204 = vmatprep.subr.mxu0 0.0
        %1205 = vmatpush1.xpose.msra.mxu0 0.0
        %1206 = vmatprep.subr.mxu0 0.0
        %1207 = vmatpush1.xpose.msra.mxu0 0.0
        %1208 = vmatprep.mubr.f32.mxu0 0.0
        %1209 = vmatmul.mubr.f32.gmra.mrb[0].mxu0 %v1140
        %v1210 = vpop.f32.mrb[0].mxu0
        %v1211 = vadd.f32 0.0, %v1210
        %v1212 = vpop.f32.mrb[0].mxu0
        %1213 = vdwg.mxu0
        %v1214 = vsel %vm991, %v973, 0
        %v1216 = vsel %vm991, %v980, 0
        %1218 = vmatprep.subr.mxu0 0.0
        %1219 = vmatpush1.xpose.msra.mxu0 %v1216
        %1220 = vmatprep.subr.mxu0 0.0
        %1221 = vmatpush1.xpose.msra.mxu0 0.0
        %1222 = vmatprep.subr.mxu0 0.0
        %1223 = vmatpush1.xpose.msra.mxu0 0.0
        %1224 = vmatprep.subr.mxu0 0.0
        %1225 = vmatpush1.xpose.msra.mxu0 0.0
        %1226 = vmatprep.subr.mxu0 0.0
        %1227 = vmatpush1.xpose.msra.mxu0 0.0
        %1228 = vmatprep.subr.mxu0 0.0
        %1229 = vmatpush1.xpose.msra.mxu0 0.0
        %1230 = vmatprep.subr.mxu0 0.0
        %1231 = vmatpush1.xpose.msra.mxu0 0.0
        %1232 = vmatprep.subr.mxu0 0.0
        %1233 = vmatpush1.xpose.msra.mxu0 0.0
        %1234 = vmatprep.subr.mxu0 0.0
        %1235 = vmatpush1.xpose.msra.mxu0 0.0
        %1236 = vmatprep.subr.mxu0 0.0
        %1237 = vmatpush1.xpose.msra.mxu0 0.0
        %1238 = vmatprep.subr.mxu0 0.0
        %1239 = vmatpush1.xpose.msra.mxu0 0.0
        %1240 = vmatprep.subr.mxu0 0.0
        %1241 = vmatpush1.xpose.msra.mxu0 0.0
        %1242 = vmatprep.subr.mxu0 0.0
        %1243 = vmatpush1.xpose.msra.mxu0 0.0
        %1244 = vmatprep.subr.mxu0 0.0
        %1245 = vmatpush1.xpose.msra.mxu0 0.0
        %1246 = vmatprep.subr.mxu0 0.0
        %1247 = vmatpush1.xpose.msra.mxu0 0.0
        %1248 = vmatprep.subr.mxu0 0.0
        %1249 = vmatpush1.xpose.msra.mxu0 0.0
        %1250 = vmatprep.subr.mxu0 0.0
        %1251 = vmatpush1.xpose.msra.mxu0 0.0
        %1252 = vmatprep.subr.mxu0 0.0
        %1253 = vmatpush1.xpose.msra.mxu0 0.0
        %1254 = vmatprep.subr.mxu0 0.0
        %1255 = vmatpush1.xpose.msra.mxu0 0.0
        %1256 = vmatprep.subr.mxu0 0.0
        %1257 = vmatpush1.xpose.msra.mxu0 0.0
        %1258 = vmatprep.subr.mxu0 0.0
        %1259 = vmatpush1.xpose.msra.mxu0 0.0
        %1260 = vmatprep.subr.mxu0 0.0
        %1261 = vmatpush1.xpose.msra.mxu0 0.0
        %1262 = vmatprep.subr.mxu0 0.0
        %1263 = vmatpush1.xpose.msra.mxu0 0.0
        %1264 = vmatprep.subr.mxu0 0.0
        %1265 = vmatpush1.xpose.msra.mxu0 0.0
        %1266 = vmatprep.subr.mxu0 0.0
        %1267 = vmatpush1.xpose.msra.mxu0 0.0
        %1268 = vmatprep.subr.mxu0 0.0
        %1269 = vmatpush1.xpose.msra.mxu0 0.0
        %1270 = vmatprep.subr.mxu0 0.0
        %1271 = vmatpush1.xpose.msra.mxu0 0.0
        %1272 = vmatprep.subr.mxu0 0.0
        %1273 = vmatpush1.xpose.msra.mxu0 0.0
        %1274 = vmatprep.subr.mxu0 0.0
        %1275 = vmatpush1.xpose.msra.mxu0 0.0
        %1276 = vmatprep.subr.mxu0 0.0
        %1277 = vmatpush1.xpose.msra.mxu0 0.0
        %1278 = vmatprep.subr.mxu0 0.0
        %1279 = vmatpush1.xpose.msra.mxu0 0.0
        %1280 = vmatprep.subr.mxu0 0.0
        %1281 = vmatpush1.xpose.msra.mxu0 0.0
        %1282 = vmatprep.mubr.f32.mxu0 0.0
        %1283 = vmatmul.mubr.f32.gmra.mrb[0].mxu0 %v1214
        %v1284 = vpop.f32.mrb[0].mxu0
        %v1285 = vadd.f32 0.0, %v1284
        %v1286 = vpop.f32.mrb[0].mxu0
        %1287 = vdwg.mxu0
        %v1288 = vmul.f32 %v1063, 0.35355338
        %v1289 = vmul.f32 %v1137, 0.35355338
        %v1290 = vmul.f32 %v1211, 0.35355338
        %v1291 = vmul.f32 %v1285, 0.35355338
        %v1292 = vld [vmem:[%s714] sm:$0x1]
        %v1293 = vmul.f32 %v1292, -1e+09
        %v1295 = vlaneseq
        %v1296 = vshrl.u32 %v1295, 7
        %v1297 = vsub.s32 0, %v1296
        %v1298 = vrot.slane %v1293, %v1297
        %v1300 = vadd.f32 %v1288, %v1298
        %v1301 = vadd.f32 %v1289, %v1298
        %v1302 = vadd.f32 %v1290, %v1298
        %v1303 = vadd.f32 %v1291, %v1298
        %v1304 = vsel %vm991, %v1300, -inf
        %1305 = vmax.xlane.f32.xlu0 %v1304
        %v1306 = vpop.xlane.xlu0 %1305
        %v1307 = vsel %vm991, %v1301, -inf
        %1308 = vmax.xlane.f32.xlu0 %v1307
        %v1309 = vpop.xlane.xlu0 %1308
        %v1310 = vsel %vm991, %v1302, -inf
        %1311 = vmax.xlane.f32.xlu0 %v1310
        %v1312 = vpop.xlane.xlu0 %1311
        %v1313 = vsel %vm991, %v1303, -inf
        %1314 = vmax.xlane.f32.xlu0 %v1313
        %v1315 = vpop.xlane.xlu0 %1314
        %v1316 = vsub.f32 %v1300, %v1306
        %v1317 = vsub.f32 %v1301, %v1309
        %v1318 = vsub.f32 %v1302, %v1312
        %v1319 = vsub.f32 %v1303, %v1315
        %v1320 = vmul.f32 %v1316, 1.442695
        %v1321 = vpow.pop %v1320
        %v1322 = vmul.f32 %v1317, 1.442695
        %v1323 = vpow.pop %v1322
        %v1324 = vmul.f32 %v1318, 1.442695
        %v1325 = vpow.pop %v1324
        %v1326 = vmul.f32 %v1319, 1.442695
        %v1327 = vpow.pop %v1326
        %v1328 = vsel %vm991, %v1321, 0.0
        %1329 = vadd.xlane.f32.xlu0 %v1328
        %v1330 = vpop.xlane.xlu0 %1329
        %v1331 = vsel %vm991, %v1323, 0.0
        %1332 = vadd.xlane.f32.xlu0 %v1331
        %v1333 = vpop.xlane.xlu0 %1332
        %v1334 = vsel %vm991, %v1325, 0.0
        %1335 = vadd.xlane.f32.xlu0 %v1334
        %v1336 = vpop.xlane.xlu0 %1335
        %v1337 = vsel %vm991, %v1327, 0.0
        %1338 = vadd.xlane.f32.xlu0 %v1337
        %v1339 = vpop.xlane.xlu0 %1338
        %v1340 = vrcp.pop %v1330
        %v1341 = vrcp.pop %v1333
        %v1342 = vrcp.pop %v1336
        %v1343 = vrcp.pop %v1339
        %v1344 = vmul.f32 %v1321, %v1340
        %v1345 = vmul.f32 %v1323, %v1341
        %v1346 = vmul.f32 %v1325, %v1342
        %v1347 = vmul.f32 %v1327, %v1343
        %v1349 = vsel %vm991, %v1344, 0
        %1351 = vmatprep.subr.mxu0 0.0
        %1352 = vmatpush1.msra.mxu0 %v964
        %1353 = vmatprep.subr.mxu0 0.0
        %1354 = vmatpush1.msra.mxu0 0.0
        %1355 = vmatprep.subr.mxu0 0.0
        %1356 = vmatpush1.msra.mxu0 0.0
        %1357 = vmatprep.subr.mxu0 0.0
        %1358 = vmatpush1.msra.mxu0 0.0
        %1359 = vmatprep.subr.mxu0 0.0
        %1360 = vmatpush1.msra.mxu0 0.0
        %1361 = vmatprep.subr.mxu0 0.0
        %1362 = vmatpush1.msra.mxu0 0.0
        %1363 = vmatprep.subr.mxu0 0.0
        %1364 = vmatpush1.msra.mxu0 0.0
        %1365 = vmatprep.subr.mxu0 0.0
        %1366 = vmatpush1.msra.mxu0 0.0
        %1367 = vmatprep.subr.mxu0 0.0
        %1368 = vmatpush1.msra.mxu0 0.0
        %1369 = vmatprep.subr.mxu0 0.0
        %1370 = vmatpush1.msra.mxu0 0.0
        %1371 = vmatprep.subr.mxu0 0.0
        %1372 = vmatpush1.msra.mxu0 0.0
        %1373 = vmatprep.subr.mxu0 0.0
        %1374 = vmatpush1.msra.mxu0 0.0
        %1375 = vmatprep.subr.mxu0 0.0
        %1376 = vmatpush1.msra.mxu0 0.0
        %1377 = vmatprep.subr.mxu0 0.0
        %1378 = vmatpush1.msra.mxu0 0.0
        %1379 = vmatprep.subr.mxu0 0.0
        %1380 = vmatpush1.msra.mxu0 0.0
        %1381 = vmatprep.subr.mxu0 0.0
        %1382 = vmatpush1.msra.mxu0 0.0
        %1383 = vmatprep.subr.mxu0 0.0
        %1384 = vmatpush1.msra.mxu0 0.0
        %1385 = vmatprep.subr.mxu0 0.0
        %1386 = vmatpush1.msra.mxu0 0.0
        %1387 = vmatprep.subr.mxu0 0.0
        %1388 = vmatpush1.msra.mxu0 0.0
        %1389 = vmatprep.subr.mxu0 0.0
        %1390 = vmatpush1.msra.mxu0 0.0
        %1391 = vmatprep.subr.mxu0 0.0
        %1392 = vmatpush1.msra.mxu0 0.0
        %1393 = vmatprep.subr.mxu0 0.0
        %1394 = vmatpush1.msra.mxu0 0.0
        %1395 = vmatprep.subr.mxu0 0.0
        %1396 = vmatpush1.msra.mxu0 0.0
        %1397 = vmatprep.subr.mxu0 0.0
        %1398 = vmatpush1.msra.mxu0 0.0
        %1399 = vmatprep.subr.mxu0 0.0
        %1400 = vmatpush1.msra.mxu0 0.0
        %1401 = vmatprep.subr.mxu0 0.0
        %1402 = vmatpush1.msra.mxu0 0.0
        %1403 = vmatprep.subr.mxu0 0.0
        %1404 = vmatpush1.msra.mxu0 0.0
        %1405 = vmatprep.subr.mxu0 0.0
        %1406 = vmatpush1.msra.mxu0 0.0
        %1407 = vmatprep.subr.mxu0 0.0
        %1408 = vmatpush1.msra.mxu0 0.0
        %1409 = vmatprep.subr.mxu0 0.0
        %1410 = vmatpush1.msra.mxu0 0.0
        %1411 = vmatprep.subr.mxu0 0.0
        %1412 = vmatpush1.msra.mxu0 0.0
        %1413 = vmatprep.subr.mxu0 0.0
        %1414 = vmatpush1.msra.mxu0 0.0
        %1415 = vmatprep.mubr.f32.mxu0 0.0
        %1416 = vmatmul.mubr.f32.gmra.mrb[0].mxu0 %v1349
        %v1417 = vpop.f32.mrb[0].mxu0
        %v1418 = vadd.f32 0.0, %v1417
        %v1419 = vpop.f32.mrb[0].mxu0
        %1420 = vdwg.mxu0
        %v1422 = vsel %vm991, %v1345, 0
        %1424 = vmatprep.subr.mxu0 0.0
        %1425 = vmatpush1.msra.mxu0 %v983
        %1426 = vmatprep.subr.mxu0 0.0
        %1427 = vmatpush1.msra.mxu0 0.0
        %1428 = vmatprep.subr.mxu0 0.0
        %1429 = vmatpush1.msra.mxu0 0.0
        %1430 = vmatprep.subr.mxu0 0.0
        %1431 = vmatpush1.msra.mxu0 0.0
        %1432 = vmatprep.subr.mxu0 0.0
        %1433 = vmatpush1.msra.mxu0 0.0
        %1434 = vmatprep.subr.mxu0 0.0
        %1435 = vmatpush1.msra.mxu0 0.0
        %1436 = vmatprep.subr.mxu0 0.0
        %1437 = vmatpush1.msra.mxu0 0.0
        %1438 = vmatprep.subr.mxu0 0.0
        %1439 = vmatpush1.msra.mxu0 0.0
        %1440 = vmatprep.subr.mxu0 0.0
        %1441 = vmatpush1.msra.mxu0 0.0
        %1442 = vmatprep.subr.mxu0 0.0
        %1443 = vmatpush1.msra.mxu0 0.0
        %1444 = vmatprep.subr.mxu0 0.0
        %1445 = vmatpush1.msra.mxu0 0.0
        %1446 = vmatprep.subr.mxu0 0.0
        %1447 = vmatpush1.msra.mxu0 0.0
        %1448 = vmatprep.subr.mxu0 0.0
        %1449 = vmatpush1.msra.mxu0 0.0
        %1450 = vmatprep.subr.mxu0 0.0
        %1451 = vmatpush1.msra.mxu0 0.0
        %1452 = vmatprep.subr.mxu0 0.0
        %1453 = vmatpush1.msra.mxu0 0.0
        %1454 = vmatprep.subr.mxu0 0.0
        %1455 = vmatpush1.msra.mxu0 0.0
        %1456 = vmatprep.subr.mxu0 0.0
        %1457 = vmatpush1.msra.mxu0 0.0
        %1458 = vmatprep.subr.mxu0 0.0
        %1459 = vmatpush1.msra.mxu0 0.0
        %1460 = vmatprep.subr.mxu0 0.0
        %1461 = vmatpush1.msra.mxu0 0.0
        %1462 = vmatprep.subr.mxu0 0.0
        %1463 = vmatpush1.msra.mxu0 0.0
        %1464 = vmatprep.subr.mxu0 0.0
        %1465 = vmatpush1.msra.mxu0 0.0
        %1466 = vmatprep.subr.mxu0 0.0
        %1467 = vmatpush1.msra.mxu0 0.0
        %1468 = vmatprep.subr.mxu0 0.0
        %1469 = vmatpush1.msra.mxu0 0.0
        %1470 = vmatprep.subr.mxu0 0.0
        %1471 = vmatpush1.msra.mxu0 0.0
        %1472 = vmatprep.subr.mxu0 0.0
        %1473 = vmatpush1.msra.mxu0 0.0
        %1474 = vmatprep.subr.mxu0 0.0
        %1475 = vmatpush1.msra.mxu0 0.0
        %1476 = vmatprep.subr.mxu0 0.0
        %1477 = vmatpush1.msra.mxu0 0.0
        %1478 = vmatprep.subr.mxu0 0.0
        %1479 = vmatpush1.msra.mxu0 0.0
        %1480 = vmatprep.subr.mxu0 0.0
        %1481 = vmatpush1.msra.mxu0 0.0
        %1482 = vmatprep.subr.mxu0 0.0
        %1483 = vmatpush1.msra.mxu0 0.0
        %1484 = vmatprep.subr.mxu0 0.0
        %1485 = vmatpush1.msra.mxu0 0.0
        %1486 = vmatprep.subr.mxu0 0.0
        %1487 = vmatpush1.msra.mxu0 0.0
        %1488 = vmatprep.mubr.f32.mxu0 0.0
        %1489 = vmatmul.mubr.f32.gmra.mrb[0].mxu0 %v1422
        %v1490 = vpop.f32.mrb[0].mxu0
        %v1491 = vadd.f32 0.0, %v1490
        %v1492 = vpop.f32.mrb[0].mxu0
        %1493 = vdwg.mxu0
        %v1495 = vsel %vm991, %v1346, 0
        %1497 = vmatprep.subr.mxu0 0.0
        %1498 = vmatpush1.msra.mxu0 %v986
        %1499 = vmatprep.subr.mxu0 0.0
        %1500 = vmatpush1.msra.mxu0 0.0
        %1501 = vmatprep.subr.mxu0 0.0
        %1502 = vmatpush1.msra.mxu0 0.0
        %1503 = vmatprep.subr.mxu0 0.0
        %1504 = vmatpush1.msra.mxu0 0.0
        %1505 = vmatprep.subr.mxu0 0.0
        %1506 = vmatpush1.msra.mxu0 0.0
        %1507 = vmatprep.subr.mxu0 0.0
        %1508 = vmatpush1.msra.mxu0 0.0
        %1509 = vmatprep.subr.mxu0 0.0
        %1510 = vmatpush1.msra.mxu0 0.0
        %1511 = vmatprep.subr.mxu0 0.0
        %1512 = vmatpush1.msra.mxu0 0.0
        %1513 = vmatprep.subr.mxu0 0.0
        %1514 = vmatpush1.msra.mxu0 0.0
        %1515 = vmatprep.subr.mxu0 0.0
        %1516 = vmatpush1.msra.mxu0 0.0
        %1517 = vmatprep.subr.mxu0 0.0
        %1518 = vmatpush1.msra.mxu0 0.0
        %1519 = vmatprep.subr.mxu0 0.0
        %1520 = vmatpush1.msra.mxu0 0.0
        %1521 = vmatprep.subr.mxu0 0.0
        %1522 = vmatpush1.msra.mxu0 0.0
        %1523 = vmatprep.subr.mxu0 0.0
        %1524 = vmatpush1.msra.mxu0 0.0
        %1525 = vmatprep.subr.mxu0 0.0
        %1526 = vmatpush1.msra.mxu0 0.0
        %1527 = vmatprep.subr.mxu0 0.0
        %1528 = vmatpush1.msra.mxu0 0.0
        %1529 = vmatprep.subr.mxu0 0.0
        %1530 = vmatpush1.msra.mxu0 0.0
        %1531 = vmatprep.subr.mxu0 0.0
        %1532 = vmatpush1.msra.mxu0 0.0
        %1533 = vmatprep.subr.mxu0 0.0
        %1534 = vmatpush1.msra.mxu0 0.0
        %1535 = vmatprep.subr.mxu0 0.0
        %1536 = vmatpush1.msra.mxu0 0.0
        %1537 = vmatprep.subr.mxu0 0.0
        %1538 = vmatpush1.msra.mxu0 0.0
        %1539 = vmatprep.subr.mxu0 0.0
        %1540 = vmatpush1.msra.mxu0 0.0
        %1541 = vmatprep.subr.mxu0 0.0
        %1542 = vmatpush1.msra.mxu0 0.0
        %1543 = vmatprep.subr.mxu0 0.0
        %1544 = vmatpush1.msra.mxu0 0.0
        %1545 = vmatprep.subr.mxu0 0.0
        %1546 = vmatpush1.msra.mxu0 0.0
        %1547 = vmatprep.subr.mxu0 0.0
        %1548 = vmatpush1.msra.mxu0 0.0
        %1549 = vmatprep.subr.mxu0 0.0
        %1550 = vmatpush1.msra.mxu0 0.0
        %1551 = vmatprep.subr.mxu0 0.0
        %1552 = vmatpush1.msra.mxu0 0.0
        %1553 = vmatprep.subr.mxu0 0.0
        %1554 = vmatpush1.msra.mxu0 0.0
        %1555 = vmatprep.subr.mxu0 0.0
        %1556 = vmatpush1.msra.mxu0 0.0
        %1557 = vmatprep.subr.mxu0 0.0
        %1558 = vmatpush1.msra.mxu0 0.0
        %1559 = vmatprep.subr.mxu0 0.0
        %1560 = vmatpush1.msra.mxu0 0.0
        %1561 = vmatprep.mubr.f32.mxu0 0.0
        %1562 = vmatmul.mubr.f32.gmra.mrb[0].mxu0 %v1495
        %v1563 = vpop.f32.mrb[0].mxu0
        %v1564 = vadd.f32 0.0, %v1563
        %v1565 = vpop.f32.mrb[0].mxu0
        %1566 = vdwg.mxu0
        %v1568 = vsel %vm991, %v1347, 0
        %1570 = vmatprep.subr.mxu0 0.0
        %1571 = vmatpush1.msra.mxu0 %v989
        %1572 = vmatprep.subr.mxu0 0.0
        %1573 = vmatpush1.msra.mxu0 0.0
        %1574 = vmatprep.subr.mxu0 0.0
        %1575 = vmatpush1.msra.mxu0 0.0
        %1576 = vmatprep.subr.mxu0 0.0
        %1577 = vmatpush1.msra.mxu0 0.0
        %1578 = vmatprep.subr.mxu0 0.0
        %1579 = vmatpush1.msra.mxu0 0.0
        %1580 = vmatprep.subr.mxu0 0.0
        %1581 = vmatpush1.msra.mxu0 0.0
        %1582 = vmatprep.subr.mxu0 0.0
        %1583 = vmatpush1.msra.mxu0 0.0
        %1584 = vmatprep.subr.mxu0 0.0
        %1585 = vmatpush1.msra.mxu0 0.0
        %1586 = vmatprep.subr.mxu0 0.0
        %1587 = vmatpush1.msra.mxu0 0.0
        %1588 = vmatprep.subr.mxu0 0.0
        %1589 = vmatpush1.msra.mxu0 0.0
        %1590 = vmatprep.subr.mxu0 0.0
        %1591 = vmatpush1.msra.mxu0 0.0
        %1592 = vmatprep.subr.mxu0 0.0
        %1593 = vmatpush1.msra.mxu0 0.0
        %1594 = vmatprep.subr.mxu0 0.0
        %1595 = vmatpush1.msra.mxu0 0.0
        %1596 = vmatprep.subr.mxu0 0.0
        %1597 = vmatpush1.msra.mxu0 0.0
        %1598 = vmatprep.subr.mxu0 0.0
        %1599 = vmatpush1.msra.mxu0 0.0
        %1600 = vmatprep.subr.mxu0 0.0
        %1601 = vmatpush1.msra.mxu0 0.0
        %1602 = vmatprep.subr.mxu0 0.0
        %1603 = vmatpush1.msra.mxu0 0.0
        %1604 = vmatprep.subr.mxu0 0.0
        %1605 = vmatpush1.msra.mxu0 0.0
        %1606 = vmatprep.subr.mxu0 0.0
        %1607 = vmatpush1.msra.mxu0 0.0
        %1608 = vmatprep.subr.mxu0 0.0
        %1609 = vmatpush1.msra.mxu0 0.0
        %1610 = vmatprep.subr.mxu0 0.0
        %1611 = vmatpush1.msra.mxu0 0.0
        %1612 = vmatprep.subr.mxu0 0.0
        %1613 = vmatpush1.msra.mxu0 0.0
        %1614 = vmatprep.subr.mxu0 0.0
        %1615 = vmatpush1.msra.mxu0 0.0
        %1616 = vmatprep.subr.mxu0 0.0
        %1617 = vmatpush1.msra.mxu0 0.0
        %1618 = vmatprep.subr.mxu0 0.0
        %1619 = vmatpush1.msra.mxu0 0.0
        %1620 = vmatprep.subr.mxu0 0.0
        %1621 = vmatpush1.msra.mxu0 0.0
        %1622 = vmatprep.subr.mxu0 0.0
        %1623 = vmatpush1.msra.mxu0 0.0
        %1624 = vmatprep.subr.mxu0 0.0
        %1625 = vmatpush1.msra.mxu0 0.0
        %1626 = vmatprep.subr.mxu0 0.0
        %1627 = vmatpush1.msra.mxu0 0.0
        %1628 = vmatprep.subr.mxu0 0.0
        %1629 = vmatpush1.msra.mxu0 0.0
        %1630 = vmatprep.subr.mxu0 0.0
        %1631 = vmatpush1.msra.mxu0 0.0
        %1632 = vmatprep.subr.mxu0 0.0
        %1633 = vmatpush1.msra.mxu0 0.0
        %1634 = vmatprep.mubr.f32.mxu0 0.0
        %1635 = vmatmul.mubr.f32.gmra.mrb[0].mxu0 %v1568
        %v1636 = vpop.f32.mrb[0].mxu0
        %v1637 = vadd.f32 0.0, %v1636
        %v1638 = vpop.f32.mrb[0].mxu0
        %1639 = vdwg.mxu0
        %v1640 = vld [vmem:[#allocation7] sm:$0xff]
        %v1641 = vld [vmem:[#allocation7 + $0x8] sm:$0xff]
        %v1642 = vld [vmem:[#allocation7 + $0x10] sm:$0xff]
        %v1643 = vld [vmem:[#allocation7 + $0x18] sm:$0xff]
        %v1645 = vsel %vm991, %v1418, 0
        %1647 = vmatprep.subr.mxu0 0.0
        %1648 = vmatpush1.msra.mxu0 %v1640
        %1649 = vmatprep.subr.mxu0 0.0
        %1650 = vmatpush1.msra.mxu0 0.0
        %1651 = vmatprep.subr.mxu0 0.0
        %1652 = vmatpush1.msra.mxu0 0.0
        %1653 = vmatprep.subr.mxu0 0.0
        %1654 = vmatpush1.msra.mxu0 0.0
        %1655 = vmatprep.subr.mxu0 0.0
        %1656 = vmatpush1.msra.mxu0 0.0
        %1657 = vmatprep.subr.mxu0 0.0
        %1658 = vmatpush1.msra.mxu0 0.0
        %1659 = vmatprep.subr.mxu0 0.0
        %1660 = vmatpush1.msra.mxu0 0.0
        %1661 = vmatprep.subr.mxu0 0.0
        %1662 = vmatpush1.msra.mxu0 0.0
        %1663 = vmatprep.subr.mxu0 0.0
        %1664 = vmatpush1.msra.mxu0 0.0
        %1665 = vmatprep.subr.mxu0 0.0
        %1666 = vmatpush1.msra.mxu0 0.0
        %1667 = vmatprep.subr.mxu0 0.0
        %1668 = vmatpush1.msra.mxu0 0.0
        %1669 = vmatprep.subr.mxu0 0.0
        %1670 = vmatpush1.msra.mxu0 0.0
        %1671 = vmatprep.subr.mxu0 0.0
        %1672 = vmatpush1.msra.mxu0 0.0
        %1673 = vmatprep.subr.mxu0 0.0
        %1674 = vmatpush1.msra.mxu0 0.0
        %1675 = vmatprep.subr.mxu0 0.0
        %1676 = vmatpush1.msra.mxu0 0.0
        %1677 = vmatprep.subr.mxu0 0.0
        %1678 = vmatpush1.msra.mxu0 0.0
        %1679 = vmatprep.subr.mxu0 0.0
        %1680 = vmatpush1.msra.mxu0 0.0
        %1681 = vmatprep.subr.mxu0 0.0
        %1682 = vmatpush1.msra.mxu0 0.0
        %1683 = vmatprep.subr.mxu0 0.0
        %1684 = vmatpush1.msra.mxu0 0.0
        %1685 = vmatprep.subr.mxu0 0.0
        %1686 = vmatpush1.msra.mxu0 0.0
        %1687 = vmatprep.subr.mxu0 0.0
        %1688 = vmatpush1.msra.mxu0 0.0
        %1689 = vmatprep.subr.mxu0 0.0
        %1690 = vmatpush1.msra.mxu0 0.0
        %1691 = vmatprep.subr.mxu0 0.0
        %1692 = vmatpush1.msra.mxu0 0.0
        %1693 = vmatprep.subr.mxu0 0.0
        %1694 = vmatpush1.msra.mxu0 0.0
        %1695 = vmatprep.subr.mxu0 0.0
        %1696 = vmatpush1.msra.mxu0 0.0
        %1697 = vmatprep.subr.mxu0 0.0
        %1698 = vmatpush1.msra.mxu0 0.0
        %1699 = vmatprep.subr.mxu0 0.0
        %1700 = vmatpush1.msra.mxu0 0.0
        %1701 = vmatprep.subr.mxu0 0.0
        %1702 = vmatpush1.msra.mxu0 0.0
        %1703 = vmatprep.subr.mxu0 0.0
        %1704 = vmatpush1.msra.mxu0 0.0
        %1705 = vmatprep.subr.mxu0 0.0
        %1706 = vmatpush1.msra.mxu0 0.0
        %1707 = vmatprep.subr.mxu0 0.0
        %1708 = vmatpush1.msra.mxu0 0.0
        %1709 = vmatprep.subr.mxu0 0.0
        %1710 = vmatpush1.msra.mxu0 0.0
        %1711 = vmatprep.mubr.f32.mxu0 0.0
        %1712 = vmatmul.mubr.f32.gmra.mrb[0].mxu0 %v1645
        %v1713 = vpop.f32.mrb[0].mxu0
        %v1714 = vadd.f32 0.0, %v1713
        %v1715 = vpop.f32.mrb[0].mxu0
        %1716 = vdwg.mxu0
        %v1718 = vsel %vm991, %v1491, 0
        %1720 = vmatprep.subr.mxu0 0.0
        %1721 = vmatpush1.msra.mxu0 %v1641
        %1722 = vmatprep.subr.mxu0 0.0
        %1723 = vmatpush1.msra.mxu0 0.0
        %1724 = vmatprep.subr.mxu0 0.0
        %1725 = vmatpush1.msra.mxu0 0.0
        %1726 = vmatprep.subr.mxu0 0.0
        %1727 = vmatpush1.msra.mxu0 0.0
        %1728 = vmatprep.subr.mxu0 0.0
        %1729 = vmatpush1.msra.mxu0 0.0
        %1730 = vmatprep.subr.mxu0 0.0
        %1731 = vmatpush1.msra.mxu0 0.0
        %1732 = vmatprep.subr.mxu0 0.0
        %1733 = vmatpush1.msra.mxu0 0.0
        %1734 = vmatprep.subr.mxu0 0.0
        %1735 = vmatpush1.msra.mxu0 0.0
        %1736 = vmatprep.subr.mxu0 0.0
        %1737 = vmatpush1.msra.mxu0 0.0
        %1738 = vmatprep.subr.mxu0 0.0
        %1739 = vmatpush1.msra.mxu0 0.0
        %1740 = vmatprep.subr.mxu0 0.0
        %1741 = vmatpush1.msra.mxu0 0.0
        %1742 = vmatprep.subr.mxu0 0.0
        %1743 = vmatpush1.msra.mxu0 0.0
        %1744 = vmatprep.subr.mxu0 0.0
        %1745 = vmatpush1.msra.mxu0 0.0
        %1746 = vmatprep.subr.mxu0 0.0
        %1747 = vmatpush1.msra.mxu0 0.0
        %1748 = vmatprep.subr.mxu0 0.0
        %1749 = vmatpush1.msra.mxu0 0.0
        %1750 = vmatprep.subr.mxu0 0.0
        %1751 = vmatpush1.msra.mxu0 0.0
        %1752 = vmatprep.subr.mxu0 0.0
        %1753 = vmatpush1.msra.mxu0 0.0
        %1754 = vmatprep.subr.mxu0 0.0
        %1755 = vmatpush1.msra.mxu0 0.0
        %1756 = vmatprep.subr.mxu0 0.0
        %1757 = vmatpush1.msra.mxu0 0.0
        %1758 = vmatprep.subr.mxu0 0.0
        %1759 = vmatpush1.msra.mxu0 0.0
        %1760 = vmatprep.subr.mxu0 0.0
        %1761 = vmatpush1.msra.mxu0 0.0
        %1762 = vmatprep.subr.mxu0 0.0
        %1763 = vmatpush1.msra.mxu0 0.0
        %1764 = vmatprep.subr.mxu0 0.0
        %1765 = vmatpush1.msra.mxu0 0.0
        %1766 = vmatprep.subr.mxu0 0.0
        %1767 = vmatpush1.msra.mxu0 0.0
        %1768 = vmatprep.subr.mxu0 0.0
        %1769 = vmatpush1.msra.mxu0 0.0
        %1770 = vmatprep.subr.mxu0 0.0
        %1771 = vmatpush1.msra.mxu0 0.0
        %1772 = vmatprep.subr.mxu0 0.0
        %1773 = vmatpush1.msra.mxu0 0.0
        %1774 = vmatprep.subr.mxu0 0.0
        %1775 = vmatpush1.msra.mxu0 0.0
        %1776 = vmatprep.subr.mxu0 0.0
        %1777 = vmatpush1.msra.mxu0 0.0
        %1778 = vmatprep.subr.mxu0 0.0
        %1779 = vmatpush1.msra.mxu0 0.0
        %1780 = vmatprep.subr.mxu0 0.0
        %1781 = vmatpush1.msra.mxu0 0.0
        %1782 = vmatprep.subr.mxu0 0.0
        %1783 = vmatpush1.msra.mxu0 0.0
        %1784 = vmatprep.mubr.f32.mxu0 0.0
        %1785 = vmatmul.mubr.f32.gmra.mrb[0].mxu0 %v1718
        %v1786 = vpop.f32.mrb[0].mxu0
        %v1787 = vadd.f32 0.0, %v1786
        %v1788 = vpop.f32.mrb[0].mxu0
        %1789 = vdwg.mxu0
        %v1791 = vsel %vm991, %v1564, 0
        %1793 = vmatprep.subr.mxu0 0.0
        %1794 = vmatpush1.msra.mxu0 %v1642
        %1795 = vmatprep.subr.mxu0 0.0
        %1796 = vmatpush1.msra.mxu0 0.0
        %1797 = vmatprep.subr.mxu0 0.0
        %1798 = vmatpush1.msra.mxu0 0.0
        %1799 = vmatprep.subr.mxu0 0.0
        %1800 = vmatpush1.msra.mxu0 0.0
        %1801 = vmatprep.subr.mxu0 0.0
        %1802 = vmatpush1.msra.mxu0 0.0
        %1803 = vmatprep.subr.mxu0 0.0
        %1804 = vmatpush1.msra.mxu0 0.0
        %1805 = vmatprep.subr.mxu0 0.0
        %1806 = vmatpush1.msra.mxu0 0.0
        %1807 = vmatprep.subr.mxu0 0.0
        %1808 = vmatpush1.msra.mxu0 0.0
        %1809 = vmatprep.subr.mxu0 0.0
        %1810 = vmatpush1.msra.mxu0 0.0
        %1811 = vmatprep.subr.mxu0 0.0
        %1812 = vmatpush1.msra.mxu0 0.0
        %1813 = vmatprep.subr.mxu0 0.0
        %1814 = vmatpush1.msra.mxu0 0.0
        %1815 = vmatprep.subr.mxu0 0.0
        %1816 = vmatpush1.msra.mxu0 0.0
        %1817 = vmatprep.subr.mxu0 0.0
        %1818 = vmatpush1.msra.mxu0 0.0
        %1819 = vmatprep.subr.mxu0 0.0
        %1820 = vmatpush1.msra.mxu0 0.0
        %1821 = vmatprep.subr.mxu0 0.0
        %1822 = vmatpush1.msra.mxu0 0.0
        %1823 = vmatprep.subr.mxu0 0.0
        %1824 = vmatpush1.msra.mxu0 0.0
        %1825 = vmatprep.subr.mxu0 0.0
        %1826 = vmatpush1.msra.mxu0 0.0
        %1827 = vmatprep.subr.mxu0 0.0
        %1828 = vmatpush1.msra.mxu0 0.0
        %1829 = vmatprep.subr.mxu0 0.0
        %1830 = vmatpush1.msra.mxu0 0.0
        %1831 = vmatprep.subr.mxu0 0.0
        %1832 = vmatpush1.msra.mxu0 0.0
        %1833 = vmatprep.subr.mxu0 0.0
        %1834 = vmatpush1.msra.mxu0 0.0
        %1835 = vmatprep.subr.mxu0 0.0
        %1836 = vmatpush1.msra.mxu0 0.0
        %1837 = vmatprep.subr.mxu0 0.0
        %1838 = vmatpush1.msra.mxu0 0.0
        %1839 = vmatprep.subr.mxu0 0.0
        %1840 = vmatpush1.msra.mxu0 0.0
        %1841 = vmatprep.subr.mxu0 0.0
        %1842 = vmatpush1.msra.mxu0 0.0
        %1843 = vmatprep.subr.mxu0 0.0
        %1844 = vmatpush1.msra.mxu0 0.0
        %1845 = vmatprep.subr.mxu0 0.0
        %1846 = vmatpush1.msra.mxu0 0.0
        %1847 = vmatprep.subr.mxu0 0.0
        %1848 = vmatpush1.msra.mxu0 0.0
        %1849 = vmatprep.subr.mxu0 0.0
        %1850 = vmatpush1.msra.mxu0 0.0
        %1851 = vmatprep.subr.mxu0 0.0
        %1852 = vmatpush1.msra.mxu0 0.0
        %1853 = vmatprep.subr.mxu0 0.0
        %1854 = vmatpush1.msra.mxu0 0.0
        %1855 = vmatprep.subr.mxu0 0.0
        %1856 = vmatpush1.msra.mxu0 0.0
        %1857 = vmatprep.mubr.f32.mxu0 0.0
        %1858 = vmatmul.mubr.f32.gmra.mrb[0].mxu0 %v1791
        %v1859 = vpop.f32.mrb[0].mxu0
        %v1860 = vadd.f32 0.0, %v1859
        %v1861 = vpop.f32.mrb[0].mxu0
        %1862 = vdwg.mxu0
        %v1864 = vsel %vm991, %v1637, 0
        %1866 = vmatprep.subr.mxu0 0.0
        %1867 = vmatpush1.msra.mxu0 %v1643
        %1868 = vmatprep.subr.mxu0 0.0
        %1869 = vmatpush1.msra.mxu0 0.0
        %1870 = vmatprep.subr.mxu0 0.0
        %1871 = vmatpush1.msra.mxu0 0.0
        %1872 = vmatprep.subr.mxu0 0.0
        %1873 = vmatpush1.msra.mxu0 0.0
        %1874 = vmatprep.subr.mxu0 0.0
        %1875 = vmatpush1.msra.mxu0 0.0
        %1876 = vmatprep.subr.mxu0 0.0
        %1877 = vmatpush1.msra.mxu0 0.0
        %1878 = vmatprep.subr.mxu0 0.0
        %1879 = vmatpush1.msra.mxu0 0.0
        %1880 = vmatprep.subr.mxu0 0.0
        %1881 = vmatpush1.msra.mxu0 0.0
        %1882 = vmatprep.subr.mxu0 0.0
        %1883 = vmatpush1.msra.mxu0 0.0
        %1884 = vmatprep.subr.mxu0 0.0
        %1885 = vmatpush1.msra.mxu0 0.0
        %1886 = vmatprep.subr.mxu0 0.0
        %1887 = vmatpush1.msra.mxu0 0.0
        %1888 = vmatprep.subr.mxu0 0.0
        %1889 = vmatpush1.msra.mxu0 0.0
        %1890 = vmatprep.subr.mxu0 0.0
        %1891 = vmatpush1.msra.mxu0 0.0
        %1892 = vmatprep.subr.mxu0 0.0
        %1893 = vmatpush1.msra.mxu0 0.0
        %1894 = vmatprep.subr.mxu0 0.0
        %1895 = vmatpush1.msra.mxu0 0.0
        %1896 = vmatprep.subr.mxu0 0.0
        %1897 = vmatpush1.msra.mxu0 0.0
        %1898 = vmatprep.subr.mxu0 0.0
        %1899 = vmatpush1.msra.mxu0 0.0
        %1900 = vmatprep.subr.mxu0 0.0
        %1901 = vmatpush1.msra.mxu0 0.0
        %1902 = vmatprep.subr.mxu0 0.0
        %1903 = vmatpush1.msra.mxu0 0.0
        %1904 = vmatprep.subr.mxu0 0.0
        %1905 = vmatpush1.msra.mxu0 0.0
        %1906 = vmatprep.subr.mxu0 0.0
        %1907 = vmatpush1.msra.mxu0 0.0
        %1908 = vmatprep.subr.mxu0 0.0
        %1909 = vmatpush1.msra.mxu0 0.0
        %1910 = vmatprep.subr.mxu0 0.0
        %1911 = vmatpush1.msra.mxu0 0.0
        %1912 = vmatprep.subr.mxu0 0.0
        %1913 = vmatpush1.msra.mxu0 0.0
        %1914 = vmatprep.subr.mxu0 0.0
        %1915 = vmatpush1.msra.mxu0 0.0
        %1916 = vmatprep.subr.mxu0 0.0
        %1917 = vmatpush1.msra.mxu0 0.0
        %1918 = vmatprep.subr.mxu0 0.0
        %1919 = vmatpush1.msra.mxu0 0.0
        %1920 = vmatprep.subr.mxu0 0.0
        %1921 = vmatpush1.msra.mxu0 0.0
        %1922 = vmatprep.subr.mxu0 0.0
        %1923 = vmatpush1.msra.mxu0 0.0
        %1924 = vmatprep.subr.mxu0 0.0
        %1925 = vmatpush1.msra.mxu0 0.0
        %1926 = vmatprep.subr.mxu0 0.0
        %1927 = vmatpush1.msra.mxu0 0.0
        %1928 = vmatprep.subr.mxu0 0.0
        %1929 = vmatpush1.msra.mxu0 0.0
        %1930 = vmatprep.mubr.f32.mxu0 0.0
        %1931 = vmatmul.mubr.f32.gmra.mrb[0].mxu0 %v1864
        %v1932 = vpop.f32.mrb[0].mxu0
        %v1933 = vadd.f32 0.0, %v1932
        %v1934 = vpop.f32.mrb[0].mxu0
        %1935 = vdwg.mxu0
        %v1936 = vsel %vm728, %v1714, 0.0
        %v1937 = vsel %vm728, %v1787, 0.0
        %v1938 = vadd.f32 %v1936, %v1937
        %v1939 = vsel %vm728, %v1860, 0.0
        %v1940 = vadd.f32 %v1938, %v1939
        %v1941 = vsel %vm728, %v1933, 0.0
        %v1942 = vadd.f32 %v1940, %v1941
        %v1943 = vld [vmem:[%s10] sm:$0x1]
        %v1945 = vlaneseq
        %v1946 = vshrl.u32 %v1945, 7
        %v1947 = vsub.s32 0, %v1946
        %v1948 = vrot.slane %v1943, %v1947
        %v1950 = vadd.f32 %v1942, %v1948
        %v1951 = vadd.f32 %v715, %v1950
        %v1952 = vsel %vm728, %v1951, 0.0
        %1953 = vadd.xlane.f32.xlu0 %v1952
        %v1954 = vpop.xlane.xlu0 %1953
        %v1955 = vrcp.pop 32.0
        %v1956 = vmul.f32 %v1954, %v1955
        %v1957 = vsub.f32 %v1951, %v1956
        %v1958 = vmul.f32 %v1957, %v1957
        %v1959 = vsel %vm728, %v1958, 0.0
        %1960 = vadd.xlane.f32.xlu0 %v1959
        %v1961 = vpop.xlane.xlu0 %1960
        %v1962 = vmul.f32 %v1961, %v1955
        %v1963 = vadd.f32 %v1962, 1e-06
        %v1964 = vrsqrt.pop %v1963
        %v1965 = vmul.f32 %v1957, %v1964
        %v1966 = vld [vmem:[%s11] sm:$0x1]
        %v1968 = vlaneseq
        %v1969 = vshrl.u32 %v1968, 7
        %v1970 = vsub.s32 0, %v1969
        %v1971 = vrot.slane %v1966, %v1970
        %v1973 = vmul.f32 %v1965, %v1971
        %v1974 = vld [vmem:[%s12] sm:$0x1]
        %v1976 = vlaneseq
        %v1977 = vshrl.u32 %v1976, 7
        %v1978 = vsub.s32 0, %v1977
        %v1979 = vrot.slane %v1974, %v1978
        %v1981 = vadd.f32 %v1973, %v1979
        %v1982 = vld [vmem:[#allocation8] sm:$0xff]
        %v1983 = vld [vmem:[#allocation8 + $0x8] sm:$0xff]
        %v1984 = vld [vmem:[#allocation8 + $0x10] sm:$0xff]
        %v1985 = vld [vmem:[#allocation8 + $0x18] sm:$0xff]
        %v1986 = vld [vmem:[%s14] sm:$0x1]
        %v1988 = vlaneseq
        %v1989 = vshrl.u32 %v1988, 7
        %v1990 = vsub.s32 0, %v1989
        %v1991 = vrot.slane %v1986, %v1990
        %v1994 = vsel %vm728, %v1981, 0
        %1996 = vmatprep.subr.mxu0 0.0
        %1997 = vmatpush1.msra.mxu0 %v1982
        %1998 = vmatprep.subr.mxu0 0.0
        %1999 = vmatpush1.msra.mxu0 %v1983
        %2000 = vmatprep.subr.mxu0 0.0
        %2001 = vmatpush1.msra.mxu0 %v1984
        %2002 = vmatprep.subr.mxu0 0.0
        %2003 = vmatpush1.msra.mxu0 %v1985
        %2004 = vmatprep.subr.mxu0 0.0
        %2005 = vmatpush1.msra.mxu0 0.0
        %2006 = vmatprep.subr.mxu0 0.0
        %2007 = vmatpush1.msra.mxu0 0.0
        %2008 = vmatprep.subr.mxu0 0.0
        %2009 = vmatpush1.msra.mxu0 0.0
        %2010 = vmatprep.subr.mxu0 0.0
        %2011 = vmatpush1.msra.mxu0 0.0
        %2012 = vmatprep.subr.mxu0 0.0
        %2013 = vmatpush1.msra.mxu0 0.0
        %2014 = vmatprep.subr.mxu0 0.0
        %2015 = vmatpush1.msra.mxu0 0.0
        %2016 = vmatprep.subr.mxu0 0.0
        %2017 = vmatpush1.msra.mxu0 0.0
        %2018 = vmatprep.subr.mxu0 0.0
        %2019 = vmatpush1.msra.mxu0 0.0
        %2020 = vmatprep.subr.mxu0 0.0
        %2021 = vmatpush1.msra.mxu0 0.0
        %2022 = vmatprep.subr.mxu0 0.0
        %2023 = vmatpush1.msra.mxu0 0.0
        %2024 = vmatprep.subr.mxu0 0.0
        %2025 = vmatpush1.msra.mxu0 0.0
        %2026 = vmatprep.subr.mxu0 0.0
        %2027 = vmatpush1.msra.mxu0 0.0
        %2028 = vmatprep.subr.mxu0 0.0
        %2029 = vmatpush1.msra.mxu0 0.0
        %2030 = vmatprep.subr.mxu0 0.0
        %2031 = vmatpush1.msra.mxu0 0.0
        %2032 = vmatprep.subr.mxu0 0.0
        %2033 = vmatpush1.msra.mxu0 0.0
        %2034 = vmatprep.subr.mxu0 0.0
        %2035 = vmatpush1.msra.mxu0 0.0
        %2036 = vmatprep.subr.mxu0 0.0
        %2037 = vmatpush1.msra.mxu0 0.0
        %2038 = vmatprep.subr.mxu0 0.0
        %2039 = vmatpush1.msra.mxu0 0.0
        %2040 = vmatprep.subr.mxu0 0.0
        %2041 = vmatpush1.msra.mxu0 0.0
        %2042 = vmatprep.subr.mxu0 0.0
        %2043 = vmatpush1.msra.mxu0 0.0
        %2044 = vmatprep.subr.mxu0 0.0
        %2045 = vmatpush1.msra.mxu0 0.0
        %2046 = vmatprep.subr.mxu0 0.0
        %2047 = vmatpush1.msra.mxu0 0.0
        %2048 = vmatprep.subr.mxu0 0.0
        %2049 = vmatpush1.msra.mxu0 0.0
        %2050 = vmatprep.subr.mxu0 0.0
        %2051 = vmatpush1.msra.mxu0 0.0
        %2052 = vmatprep.subr.mxu0 0.0
        %2053 = vmatpush1.msra.mxu0 0.0
        %2054 = vmatprep.subr.mxu0 0.0
        %2055 = vmatpush1.msra.mxu0 0.0
        %2056 = vmatprep.subr.mxu0 0.0
        %2057 = vmatpush1.msra.mxu0 0.0
        %2058 = vmatprep.subr.mxu0 0.0
        %2059 = vmatpush1.msra.mxu0 0.0
        %2060 = vmatprep.mubr.f32.mxu0 0.0
        %2061 = vmatmul.mubr.f32.gmra.mrb[0].mxu0 %v1994
        %v2062 = vpop.f32.mrb[0].mxu0
        %v2063 = vadd.f32 %v1991, %v2062
        %v2064 = vpop.f32.mrb[0].mxu0
        %2065 = vdwg.mxu0
        %v2066 = vmax.f32 %v2063, 0.0
        %v2067 = vld [vmem:[%s15] sm:$0xff]
        %v2068 = vld [vmem:[%s15 + $0x8] sm:$0xff]
        %v2069 = vld [vmem:[%s15 + $0x10] sm:$0xff]
        %v2070 = vld [vmem:[%s15 + $0x18] sm:$0xff]
        %v2071 = vld [vmem:[%s15 + $0x20] sm:$0xff]
        %v2072 = vld [vmem:[%s15 + $0x28] sm:$0xff]
        %v2073 = vld [vmem:[%s15 + $0x30] sm:$0xff]
        %v2074 = vld [vmem:[%s15 + $0x38] sm:$0xff]
        %v2075 = vld [vmem:[%s16] sm:$0x1]
        %v2077 = vlaneseq
        %v2078 = vshrl.u32 %v2077, 7
        %v2079 = vsub.s32 0, %v2078
        %v2080 = vrot.slane %v2075, %v2079
        %vm2082 = vcmask 523264
        %v2084 = vsel %vm2082, %v2066, 0
        %2086 = vmatprep.subr.mxu0 0.0
        %2087 = vmatpush1.msra.mxu0 %v2067
        %2088 = vmatprep.subr.mxu0 0.0
        %2089 = vmatpush1.msra.mxu0 %v2068
        %2090 = vmatprep.subr.mxu0 0.0
        %2091 = vmatpush1.msra.mxu0 %v2069
        %2092 = vmatprep.subr.mxu0 0.0
        %2093 = vmatpush1.msra.mxu0 %v2070
        %2094 = vmatprep.subr.mxu0 0.0
        %2095 = vmatpush1.msra.mxu0 %v2071
        %2096 = vmatprep.subr.mxu0 0.0
        %2097 = vmatpush1.msra.mxu0 %v2072
        %2098 = vmatprep.subr.mxu0 0.0
        %2099 = vmatpush1.msra.mxu0 %v2073
        %2100 = vmatprep.subr.mxu0 0.0
        %2101 = vmatpush1.msra.mxu0 %v2074
        %2102 = vmatprep.subr.mxu0 0.0
        %2103 = vmatpush1.msra.mxu0 0.0
        %2104 = vmatprep.subr.mxu0 0.0
        %2105 = vmatpush1.msra.mxu0 0.0
        %2106 = vmatprep.subr.mxu0 0.0
        %2107 = vmatpush1.msra.mxu0 0.0
        %2108 = vmatprep.subr.mxu0 0.0
        %2109 = vmatpush1.msra.mxu0 0.0
        %2110 = vmatprep.subr.mxu0 0.0
        %2111 = vmatpush1.msra.mxu0 0.0
        %2112 = vmatprep.subr.mxu0 0.0
        %2113 = vmatpush1.msra.mxu0 0.0
        %2114 = vmatprep.subr.mxu0 0.0
        %2115 = vmatpush1.msra.mxu0 0.0
        %2116 = vmatprep.subr.mxu0 0.0
        %2117 = vmatpush1.msra.mxu0 0.0
        %2118 = vmatprep.subr.mxu0 0.0
        %2119 = vmatpush1.msra.mxu0 0.0
        %2120 = vmatprep.subr.mxu0 0.0
        %2121 = vmatpush1.msra.mxu0 0.0
        %2122 = vmatprep.subr.mxu0 0.0
        %2123 = vmatpush1.msra.mxu0 0.0
        %2124 = vmatprep.subr.mxu0 0.0
        %2125 = vmatpush1.msra.mxu0 0.0
        %2126 = vmatprep.subr.mxu0 0.0
        %2127 = vmatpush1.msra.mxu0 0.0
        %2128 = vmatprep.subr.mxu0 0.0
        %2129 = vmatpush1.msra.mxu0 0.0
        %2130 = vmatprep.subr.mxu0 0.0
        %2131 = vmatpush1.msra.mxu0 0.0
        %2132 = vmatprep.subr.mxu0 0.0
        %2133 = vmatpush1.msra.mxu0 0.0
        %2134 = vmatprep.subr.mxu0 0.0
        %2135 = vmatpush1.msra.mxu0 0.0
        %2136 = vmatprep.subr.mxu0 0.0
        %2137 = vmatpush1.msra.mxu0 0.0
        %2138 = vmatprep.subr.mxu0 0.0
        %2139 = vmatpush1.msra.mxu0 0.0
        %2140 = vmatprep.subr.mxu0 0.0
        %2141 = vmatpush1.msra.mxu0 0.0
        %2142 = vmatprep.subr.mxu0 0.0
        %2143 = vmatpush1.msra.mxu0 0.0
        %2144 = vmatprep.subr.mxu0 0.0
        %2145 = vmatpush1.msra.mxu0 0.0
        %2146 = vmatprep.subr.mxu0 0.0
        %2147 = vmatpush1.msra.mxu0 0.0
        %2148 = vmatprep.subr.mxu0 0.0
        %2149 = vmatpush1.msra.mxu0 0.0
        %2150 = vmatprep.mubr.f32.mxu0 0.0
        %2151 = vmatmul.mubr.f32.gmra.mrb[0].mxu0 %v2084
        %v2152 = vpop.f32.mrb[0].mxu0
        %v2153 = vadd.f32 %v2080, %v2152
        %v2154 = vpop.f32.mrb[0].mxu0
        %2155 = vdwg.mxu0
        %v2156 = vadd.f32 %v1981, %v2153
        %v2157 = vsel %vm728, %v2156, 0.0
        %2158 = vadd.xlane.f32.xlu0 %v2157
        %v2159 = vpop.xlane.xlu0 %2158
        %v2160 = vmul.f32 %v2159, %v1955
        %v2161 = vsub.f32 %v2156, %v2160
        %v2162 = vmul.f32 %v2161, %v2161
        %v2163 = vsel %vm728, %v2162, 0.0
        %2164 = vadd.xlane.f32.xlu0 %v2163
        %v2165 = vpop.xlane.xlu0 %2164
        %v2166 = vmul.f32 %v2165, %v1955
        %v2167 = vadd.f32 %v2166, 1e-06
        %v2168 = vrsqrt.pop %v2167
        %v2169 = vmul.f32 %v2161, %v2168
        %v2170 = vld [vmem:[%s17] sm:$0x1]
        %v2172 = vlaneseq
        %v2173 = vshrl.u32 %v2172, 7
        %v2174 = vsub.s32 0, %v2173
        %v2175 = vrot.slane %v2170, %v2174
        %v2177 = vmul.f32 %v2169, %v2175
        %v2178 = vld [vmem:[%s18] sm:$0x1]
        %v2180 = vlaneseq
        %v2181 = vshrl.u32 %v2180, 7
        %v2182 = vsub.s32 0, %v2181
        %v2183 = vrot.slane %v2178, %v2182
        %v2185 = vadd.f32 %v2177, %v2183
        %2186 = vst.msk [vmem:[%s711] sm:$0xff] %vm728, %v2185
        %s2187 = sand.u32 %s478, 1
        %s2188 = scalar_lea.sflag [#allocation4], %s2187
        %s2189 = sand.u32 %s478, 1
        %s2190 = smul.addr %s2189, 8
        %s2191 = scalar_lea.vmem [#allocation10], %s2190
        // Predicated region
        $region113: #{tpu_custom_call.1} parent=95 // pred_check
          %p2192 = pneg %p488
        $region114: #{tpu_custom_call.1} parent=95 // pred_check_branch
          %2194 = sbr.rel (%p2192) target = $region116
        $region115: #{tpu_custom_call.1} parent=95 // pred_region
          %s2196 = ssub.s32 128, 128
          %2197 = vsyncadd %s2188, %s2196
          %s2198 = sadd.s32 %s45, %s44
          %s2199 = smul.addr %s2198, 128
          %s2200 = scalar_lea.hbm %s19, %s2199
          %s2202 = sshll.u32 %s2191, 4
          %s2203 = int_to_ptr.vmem [resolvable:$true] %s2202
          %2205 = dma.vmem_to_hbm [thread:$0]  %s2203, 128, %s2200, %s2188
        $region116: #{tpu_custom_call.1} parent=95 // pred_fallthru
          _
      $region96: #{tpu_custom_call.1} parent=5 // pred_fallthru
        _
      %p2206 = scmp.le.s32.totalorder 2, %s35
      // Predicated region
      $region117: #{tpu_custom_call.1} parent=5 // pred_check
        %p2207 = pneg %p2206
      $region118: #{tpu_custom_call.1} parent=5 // pred_check_branch
        %2209 = sbr.rel (%p2207) target = $region120
      $region119: #{tpu_custom_call.1} parent=5 // pred_region
        %s2210 = ssub.s32 %s35, 2
        // Predicated region
        $region121: #{tpu_custom_call.1} parent=119 // pred_check
          %p2211 = pneg %p494
        $region122: #{tpu_custom_call.1} parent=119 // pred_check_branch
          %2213 = sbr.rel (%p2211) target = $region124
        $region123: #{tpu_custom_call.1} parent=119 // pred_region
          %s2214 = sand.u32 %s479, 1
          %s2215 = scalar_lea.sflag [#allocation4], %s2214
          %s2216 = sand.u32 %s479, 1
          %s2217 = smul.addr %s2216, 8
          %s2218 = scalar_lea.vmem [#allocation10], %s2217
          %2219 = dma.done %s2215, 128
        $region124: #{tpu_custom_call.1} parent=119 // pred_fallthru
          _
      $region120: #{tpu_custom_call.1} parent=5 // pred_fallthru
        _
    $region6: #{tpu_custom_call.1} parent=1 // loop_footer
      %s39 = sadd.s32 1, %s35
    $region7: #{tpu_custom_call.1} parent=1 // loop_footer_branch
      %34 = sbr.rel target = $region3
    $region8: #{tpu_custom_call.1} parent=1 // loop_exit
      _
    %2220 = vsyncpa [#allocation3], 1
    %s2221 = scalar_lea.sflag [#allocation3], 1
    %2222 = vsyncpa %s2221, 1
    %2223 = vsyncpa [#allocation6], 1
    %s2224 = scalar_lea.sflag [#allocation6], 1
    %2225 = vsyncpa %s2224, 1
    %2226 = vsyncpa [#allocation9], 1
    %2227 = vsyncpa [#allocation4], 1
    %s2228 = scalar_lea.sflag [#allocation4], 1
    %2229 = vsyncpa %s2228, 1

</llo_original>
